<compile_context>
chip_gen: v6e
topology: v6e:2x2x1
jax: 0.10.0
libtpu: 0.0.40
codegen_flags: <defaults>
</compile_context>

<pallas_src>
import functools

import numpy as np
import jax
import jax.numpy as jnp
from jax.experimental import pallas as pl
from jax.experimental.pallas import tpu as pltpu


# ----------------------------------------------------------------------------
# VMEM budgeting (re-derived per generation: v5e/v6e 128 MiB, v7x 64 MiB)
# ----------------------------------------------------------------------------
@functools.lru_cache(maxsize=None)
def _vmem_limits():
    try:
        cap = int(pltpu.get_tpu_info().vmem_capacity_bytes)
    except Exception:
        cap = 64 * 1024 * 1024                      # conservative (v7x size)
    limit = min(cap * 7 // 8, 100 * 1024 * 1024)     # ~56 MiB v7x, 100 MiB v5e/v6e
    budget = limit * 3 // 4                          # headroom for mosaic scratch
    return int(limit), int(budget)


def _pick_bm(M, bytes_per_row, fixed_bytes, budget, max_bm=2048):
    """Largest multiple-of-8 row tile fitting `budget`; >=2 grid steps when M
    allows it (keeps both v7x TensorCores busy with dimension_semantics
    ('parallel',))."""
    if M <= 512:
        if M >= 128 and M % 16 == 0:
            return M // 2                            # two blocks, still exempt-safe
        return M                                     # full-dim block ((8,128)-exempt)
    avail = max(budget - fixed_bytes, 8 * bytes_per_row)
    bm = min(int(avail // bytes_per_row), max_bm, -(-M // 2))
    return max(8, (bm // 8) * 8)


# ----------------------------------------------------------------------------
# Pallas kernel: fused  out = relu?(x @ w + b)   (M-tiled, full K and N)
# ----------------------------------------------------------------------------
def _linear_kernel(x_ref, w_ref, b_ref, o_ref, *, relu):
    w = w_ref[...]
    # Cast the activation to the weight (MXU operand) dtype *inside* the
    # kernel — no wrapper-side cast, no extra HBM round trip.
    y = jnp.dot(x_ref[...].astype(w.dtype), w, preferred_element_type=jnp.float32)
    y = y + b_ref[...]                               # (1, N) bias broadcasts
    if relu:
        y = jnp.maximum(y, 0.0)
    o_ref[...] = y.astype(o_ref.dtype)


def pallas_linear(x, w, b, *, relu=False, out_dtype=jnp.float32, fuse_input=False):
    """x: (M, K), w: (K, N), b: (1, N) -> (M, N) in out_dtype.

    Tiled over M only (K, N whole per block): no accumulator needed; grid axis
    is 'parallel' (megacore) and BlockSpec double-buffers the HBM DMA.
    """
    M, K = x.shape
    K2, N = w.shape
    assert K == K2 and b.shape == (1, N)
    x_item = jnp.dtype(x.dtype).itemsize
    w_item = jnp.dtype(w.dtype).itemsize
    o_item = jnp.dtype(out_dtype).itemsize

    limit, budget = _vmem_limits()
    per_row = 2 * (K * x_item + N * o_item)          # double-buffered x/out tiles
    fixed = 2 * (K * N * w_item + N * 4)             # weight + bias (2 buffers)
    bm = _pick_bm(M, per_row, fixed, budget)
    grid_m = pl.cdiv(M, bm)

    cost = pl.CostEstimate(
        flops=2 * M * K * N,
        transcendentals=0,
        bytes_accessed=M * K * x_item + K * N * w_item + N * 4 + M * N * o_item)

    return pl.pallas_call(
        functools.partial(_linear_kernel, relu=relu),
        out_shape=jax.ShapeDtypeStruct((M, N), out_dtype),
        grid=(grid_m,),
        in_specs=[
            pl.BlockSpec((bm, K), lambda i: (i, 0)),
            pl.BlockSpec((K, N), lambda i: (0, 0)),
            pl.BlockSpec((1, N), lambda i: (0, 0)),
        ],
        out_specs=pl.BlockSpec((bm, N), lambda i: (i, 0)),
        compiler_params=pltpu.CompilerParams(
            dimension_semantics=("parallel",),
            vmem_limit_bytes=limit,
            # Let XLA fuse the im2col slice/concat producer into the operand
            # instead of materializing the 4-9x column matrix in HBM.
            allow_input_fusion=[bool(fuse_input), False, False]),
        cost_estimate=cost,
    )(x, w, b)


# ----------------------------------------------------------------------------
# Pallas kernel: fused tail  head = (relu(x @ Wh + bh)) @ Wo + bo
# (actor|critic hidden and both output heads in ONE call, two MXU dots in VMEM)
# ----------------------------------------------------------------------------
def _actor_critic_head_kernel(x_ref, wh_ref, bh_ref, wo_ref, bo_ref, o_ref):
    wh = wh_ref[...]
    h = jnp.dot(x_ref[...].astype(wh.dtype), wh, preferred_element_type=jnp.float32)
    h = jnp.maximum(h + bh_ref[...], 0.0)
    wo = wo_ref[...]
    y = jnp.dot(h.astype(wo.dtype), wo, preferred_element_type=jnp.float32)
    o_ref[...] = (y + bo_ref[...]).astype(o_ref.dtype)


def pallas_actor_critic_head(x, w_h, b_h, w_o, b_o):
    """x: (M, K) flat conv features -> (M, head_n) f32 (logits | value | pad)."""
    M, K = x.shape
    K2, F = w_h.shape
    F2, N = w_o.shape
    assert K == K2 and F == F2 and b_h.shape == (1, F) and b_o.shape == (1, N)
    x_item = jnp.dtype(x.dtype).itemsize
    w_item = jnp.dtype(w_h.dtype).itemsize

    limit, budget = _vmem_limits()
    per_row = 2 * (K * x_item + N * 4) + F * 4       # + live f32 hidden rows
    fixed = 2 * ((K * F + F * N) * w_item + (F + N) * 4)
    bm = _pick_bm(M, per_row, fixed, budget)
    grid_m = pl.cdiv(M, bm)

    cost = pl.CostEstimate(
        flops=2 * M * (K * F + F * N),
        transcendentals=0,
        bytes_accessed=(M * K * x_item + (K * F + F * N) * w_item
                        + (F + N) * 4 + M * N * 4))

    return pl.pallas_call(
        _actor_critic_head_kernel,
        out_shape=jax.ShapeDtypeStruct((M, N), jnp.float32),
        grid=(grid_m,),
        in_specs=[
            pl.BlockSpec((bm, K), lambda i: (i, 0)),
            pl.BlockSpec((K, F), lambda i: (0, 0)),
            pl.BlockSpec((1, F), lambda i: (0, 0)),
            pl.BlockSpec((F, N), lambda i: (0, 0)),
            pl.BlockSpec((1, N), lambda i: (0, 0)),
        ],
        out_specs=pl.BlockSpec((bm, N), lambda i: (i, 0)),
        compiler_params=pltpu.CompilerParams(
            dimension_semantics=("parallel",),
            vmem_limit_bytes=limit),
        cost_estimate=cost,
    )(x, w_h, b_h, w_o, b_o)


# ----------------------------------------------------------------------------
# im2col glue (pure JAX reshuffle; fused into the pallas operand via
# allow_input_fusion — no compute of its own)
# ----------------------------------------------------------------------------
def im2col(x_nhwc, kh, kw, stride):
    """x: (B, H, W, C) -> (B*OH*OW, kh*kw*C), patch order (ki, kj, c)."""
    B, H, W, C = x_nhwc.shape
    oh = (H - kh) // stride + 1
    ow = (W - kw) // stride + 1
    patches = []
    for i in range(kh):
        for j in range(kw):
            patches.append(
                x_nhwc[:, i:i + stride * oh:stride, j:j + stride * ow:stride, :])
    cols = jnp.concatenate(patches, axis=-1)          # (B, OH, OW, kh*kw*C)
    return cols.reshape(B * oh * ow, kh * kw * C), oh, ow


# ----------------------------------------------------------------------------
# Deterministic orthogonal init (mirrors torch.nn.init.orthogonal_ semantics)
# ----------------------------------------------------------------------------
def orthogonal_init(key, shape, gain):
    flat = (shape[0], int(np.prod(shape[1:])))
    a = jax.random.normal(key, (max(flat), min(flat)), dtype=jnp.float32)
    q, r = jnp.linalg.qr(a)
    q = q * jnp.sign(jnp.diagonal(r))
    if flat[0] < flat[1]:
        q = q.T
    return (gain * q[:flat[0], :flat[1]]).reshape(shape).astype(jnp.float32)


def conv_w_to_mat(w_oihw):
    """(Cout, Cin, KH, KW) torch conv weight -> (KH*KW*Cin, Cout) matmul mat
    matching the im2col patch order (ki, kj, c)."""
    co, ci, kh, kw = w_oihw.shape
    return jnp.transpose(w_oihw, (2, 3, 1, 0)).reshape(kh * kw * ci, co)


def init_params(key, input_shape, action_size, fc_units):
    channels, height, width = input_shape
    ks = jax.random.split(key, 7)
    sqrt2 = float(np.sqrt(2.0))

    # torch-layout weights (also returned raw for the XLA reference check)
    w1_t = orthogonal_init(ks[0], (32, channels, 8, 8), sqrt2)
    w2_t = orthogonal_init(ks[1], (64, 32, 4, 4), sqrt2)
    w3_t = orthogonal_init(ks[2], (64, 64, 3, 3), sqrt2)

    # conv output spatial size (VALID, strides 4/2/1)
    h = (height - 8) // 4 + 1; w = (width - 8) // 4 + 1
    h = (h - 4) // 2 + 1;       w = (w - 4) // 2 + 1
    h = (h - 3) // 1 + 1;       w = (w - 3) // 1 + 1
    flat_size = 64 * h * w

    wa1_t = orthogonal_init(ks[3], (fc_units, flat_size), sqrt2)
    wa2_t = orthogonal_init(ks[4], (action_size, fc_units), 0.01)
    wc1_t = orthogonal_init(ks[5], (fc_units, flat_size), sqrt2)
    wc2_t = orthogonal_init(ks[6], (1, fc_units), 1.0)

    raw = dict(w1=w1_t, w2=w2_t, w3=w3_t,
               wa1=wa1_t, wa2=wa2_t, wc1=wc1_t, wc2=wc2_t)

    # --- fused / pre-permuted params for the Pallas forward ---------------
    # hidden layer: actor_fc | critic_fc fused along N; rows permuted from
    # torch CHW-flatten order to NHWC-flatten order so the conv3 activation
    # needs no transpose before flattening.
    w_hidden_chw = jnp.concatenate([wa1_t.T, wc1_t.T], axis=1)    # (flat, 2*fc)
    hi, wi, ci = np.meshgrid(np.arange(h), np.arange(w), np.arange(64),
                             indexing="ij")
    perm = (ci * (h * w) + hi * w + wi).reshape(-1)               # NHWC -> CHW row idx
    w_hidden = w_hidden_chw[perm]

    # output heads: block-diagonal [wa2 ; wc2], N zero-padded to a lane-dense
    # 128 so the final store is a full-width unmasked vst.
    head_n = max(128, ((action_size + 1 + 127) // 128) * 128)
    w_head = jnp.zeros((2 * fc_units, head_n), jnp.float32)
    w_head = w_head.at[:fc_units, :action_size].set(wa2_t.T)
    w_head = w_head.at[fc_units:, action_size].set(wc2_t[0])

    # Biases: the PyTorch module calls layer_init(..., bias_const=0.0), i.e.
    # all biases are explicitly zero — zeros here match the spec exactly.
    z = lambda n: jnp.zeros((1, n), jnp.float32)
    params = dict(
        w1=conv_w_to_mat(w1_t), b1=z(32),
        w2=conv_w_to_mat(w2_t), b2=z(64),
        w3=conv_w_to_mat(w3_t), b3=z(64),
        w_hidden=w_hidden, b_hidden=z(2 * fc_units),
        w_head=w_head, b_head=z(head_n),
    )
    return params, raw


def cast_params(params, dtype):
    """Cast matmul weights to the MXU operand dtype; keep biases in f32
    (bias add happens on the f32 accumulator inside the kernels)."""
    return {k: (v.astype(dtype) if k.startswith("w") else v)
            for k, v in params.items()}


# ----------------------------------------------------------------------------
# Forward pass (ActorCritic.forward)
# ----------------------------------------------------------------------------
def actor_critic_forward(params, state_nchw, *, action_size):
    B = state_nchw.shape[0]
    x = jnp.transpose(state_nchw, (0, 2, 3, 1)).astype(jnp.float32)   # NHWC
    # Conv activations are emitted in the weight dtype (bf16 on the deployment
    # path), so the downstream im2col matrices are built and re-read in bf16.
    act_dtype = params["w1"].dtype
    # TODO(synk): once im2col is in-kernel, pad conv channels to 128 in VMEM
    # only (lane-dense stores) without blowing up downstream HBM bytes.

    cols, oh, ow = im2col(x, 8, 8, 4)
    x = pallas_linear(cols, params["w1"], params["b1"], relu=True,
                      out_dtype=act_dtype, fuse_input=True)
    x = x.reshape(B, oh, ow, 32)

    cols, oh, ow = im2col(x, 4, 4, 2)
    x = pallas_linear(cols, params["w2"], params["b2"], relu=True,
                      out_dtype=act_dtype, fuse_input=True)
    x = x.reshape(B, oh, ow, 64)

    cols, oh, ow = im2col(x, 3, 3, 1)
    x = pallas_linear(cols, params["w3"], params["b3"], relu=True,
                      out_dtype=act_dtype, fuse_input=True)
    x = x.reshape(B, oh, ow, 64)

    # No transpose: hidden-layer weight rows were permuted at init to match
    # NHWC flatten order.
    flat = x.reshape(B, -1)

    # Fused tail: actor|critic hidden + both heads in one pallas_call.
    head = pallas_actor_critic_head(flat, params["w_hidden"], params["b_hidden"],
                                    params["w_head"], params["b_head"])
    action_logits = head[:, :action_size]
    state_value = head[:, action_size:action_size + 1]
    return action_logits, state_value


# ----------------------------------------------------------------------------
# Pure-XLA reference that mirrors the PyTorch module exactly (for validation)
# ----------------------------------------------------------------------------
def reference_forward(raw, state_nchw):
    x = state_nchw.astype(jnp.float32)

    def conv(x, w_oihw, stride):
        return jax.lax.conv_general_dilated(
            x, w_oihw, window_strides=(stride, stride), padding="VALID",
            dimension_numbers=("NCHW", "OIHW", "NCHW"))

    x = jnp.maximum(conv(x, raw["w1"], 4), 0.0)
    x = jnp.maximum(conv(x, raw["w2"], 2), 0.0)
    x = jnp.maximum(conv(x, raw["w3"], 1), 0.0)
    flat = x.reshape(x.shape[0], -1)                  # NCHW flatten = torch order

    actor_hidden = jnp.maximum(flat @ raw["wa1"].T, 0.0)
    action_logits = actor_hidden @ raw["wa2"].T
    critic_hidden = jnp.maximum(flat @ raw["wc1"].T, 0.0)
    state_value = critic_hidden @ raw["wc2"].T
    return action_logits, state_value


# ----------------------------------------------------------------------------
if __name__ == "__main__":
    # Smallest spatial size the conv stack accepts is 36x36 (-> 8 -> 3 -> 1).
    B, C, H, W = 2, 4, 36, 36
    ACTION_SIZE = 6
    FC_UNITS = 128

    key = jax.random.PRNGKey(0)
    pkey, xkey = jax.random.split(key)
    params_f32, raw = init_params(pkey, (C, H, W), ACTION_SIZE, FC_UNITS)
    params_bf16 = cast_params(params_f32, jnp.bfloat16)   # deployment path
    state = jax.random.normal(xkey, (B, C, H, W), dtype=jnp.float32)

    fwd = jax.jit(functools.partial(actor_critic_forward,
                                    action_size=ACTION_SIZE))

    # ---- f32 operands: validate against the XLA reference of the module ----
    logits, value = fwd(params_f32, state)
    jax.block_until_ready((logits, value))
    assert logits.shape == (B, ACTION_SIZE), logits.shape
    assert value.shape == (B, 1), value.shape
    ref_logits, ref_value = jax.jit(reference_forward)(raw, state)
    np.testing.assert_allclose(np.asarray(logits), np.asarray(ref_logits),
                               rtol=1e-2, atol=1e-2)
    np.testing.assert_allclose(np.asarray(value), np.asarray(ref_value),
                               rtol=1e-2, atol=1e-2)

    # ---- bf16 operands / bf16 intermediates (f32 MXU accumulation): now
    # accuracy-checked against the f32 reference at a bf16-appropriate tol ----
    l16, v16 = fwd(params_bf16, state)
    jax.block_until_ready((l16, v16))
    assert bool(jnp.all(jnp.isfinite(l16))) and bool(jnp.all(jnp.isfinite(v16)))
    np.testing.assert_allclose(np.asarray(l16), np.asarray(ref_logits),
                               rtol=5e-2, atol=5e-2)
    np.testing.assert_allclose(np.asarray(v16), np.asarray(ref_value),
                               rtol=5e-2, atol=5e-2)

    print("KERNEL_OK")
</pallas_src>

<mosaic_0001>
module attributes {stable_mosaic.version = 11 : i64} {
  func.func @_linear_kernel(%arg0: i32, %arg1: memref<64x256xf32, #tpu.memory_space<vmem>>, %arg2: memref<256x32xf32, #tpu.memory_space<vmem>>, %arg3: memref<1x32xf32, #tpu.memory_space<vmem>>, %arg4: memref<64x32xf32, #tpu.memory_space<vmem>>) attributes {dimension_semantics = [#tpu.dimension_semantics<parallel>], iteration_bounds = array<i64: 2>, scalar_prefetch = 0 : i64, scratch_operands = 0 : i64, tpu.core_type = #tpu.core_type<tc>, window_params = [{transform_indices = @transform_0, window_bounds = array<i64: 64, 256>}, {pipeline_mode = #tpu.pipeline_mode<synchronous>, transform_indices = @transform_1, window_bounds = array<i64: 256, 32>}, {pipeline_mode = #tpu.pipeline_mode<synchronous>, transform_indices = @transform_2, window_bounds = array<i64: 1, 32>}, {transform_indices = @transform_3, window_bounds = array<i64: 64, 32>}]} {
    %c0 = arith.constant 0 : index
    %c0_0 = arith.constant 0 : index
    %0 = vector.load %arg2[%c0, %c0_0] : memref<256x32xf32, #tpu.memory_space<vmem>>, vector<256x32xf32>
    %c0_1 = arith.constant 0 : index
    %c0_2 = arith.constant 0 : index
    %1 = vector.load %arg1[%c0_1, %c0_2] : memref<64x256xf32, #tpu.memory_space<vmem>>, vector<64x256xf32>
    %cst = arith.constant dense<0.000000e+00> : vector<64x32xf32>
    %2 = tpu.matmul %1, %0, %cst {dimension_numbers = #tpu.dot_dimension_numbers<[1], [0], [0], [1], [0, 0, 1, 1], [], []>} : vector<64x256xf32>, vector<256x32xf32>, vector<64x32xf32> -> vector<64x32xf32>
    %c0_3 = arith.constant 0 : index
    %c0_4 = arith.constant 0 : index
    %3 = vector.load %arg3[%c0_3, %c0_4] : memref<1x32xf32, #tpu.memory_space<vmem>>, vector<1x32xf32>
    %4 = vector.broadcast %3 : vector<1x32xf32> to vector<64x32xf32>
    %5 = arith.addf %2, %4 : vector<64x32xf32>
    %cst_5 = arith.constant 0.000000e+00 : f32
    %6 = vector.broadcast %cst_5 : f32 to vector<64x32xf32>
    %7 = arith.maximumf %5, %6 : vector<64x32xf32>
    %c0_6 = arith.constant 0 : index
    %c0_7 = arith.constant 0 : index
    %8 = vector.load %arg4[%c0_6, %c0_7] : memref<64x32xf32, #tpu.memory_space<vmem>>, vector<64x32xf32>
    tpu.vector_store %arg4[%c0_6, %c0_7], %7 {strides = array<i32>} : memref<64x32xf32, #tpu.memory_space<vmem>>, vector<64x32xf32>,
    return
  }
  func.func @transform_0(%arg0: i32) -> (i32, i32) {
    %c0_i32 = arith.constant 0 : i32
    %c0_i32_0 = arith.constant 0 : i32
    return %arg0, %c0_i32 : i32, i32
  }
  func.func @transform_1(%arg0: i32) -> (i32, i32) {
    %c0_i32 = arith.constant 0 : i32
    %c0_i32_0 = arith.constant 0 : i32
    %c0_i32_1 = arith.constant 0 : i32
    return %c0_i32, %c0_i32_0 : i32, i32
  }
  func.func @transform_2(%arg0: i32) -> (i32, i32) {
    %c0_i32 = arith.constant 0 : i32
    %c0_i32_0 = arith.constant 0 : i32
    %c0_i32_1 = arith.constant 0 : i32
    return %c0_i32, %c0_i32_0 : i32, i32
  }
  func.func @transform_3(%arg0: i32) -> (i32, i32) {
    %c0_i32 = arith.constant 0 : i32
    %c0_i32_0 = arith.constant 0 : i32
    return %arg0, %c0_i32 : i32, i32
  }
}

module attributes {stable_mosaic.version = 11 : i64} {
  func.func @_linear_kernel(%arg0: i32, %arg1: memref<18x512xf32, #tpu.memory_space<vmem>>, %arg2: memref<512x64xf32, #tpu.memory_space<vmem>>, %arg3: memref<1x64xf32, #tpu.memory_space<vmem>>, %arg4: memref<18x64xf32, #tpu.memory_space<vmem>>) attributes {dimension_semantics = [#tpu.dimension_semantics<parallel>], iteration_bounds = array<i64: 1>, scalar_prefetch = 0 : i64, scratch_operands = 0 : i64, tpu.core_type = #tpu.core_type<tc>, window_params = [{transform_indices = @transform_0, window_bounds = array<i64: 18, 512>}, {pipeline_mode = #tpu.pipeline_mode<synchronous>, transform_indices = @transform_1, window_bounds = array<i64: 512, 64>}, {pipeline_mode = #tpu.pipeline_mode<synchronous>, transform_indices = @transform_2, window_bounds = array<i64: 1, 64>}, {transform_indices = @transform_3, window_bounds = array<i64: 18, 64>}]} {
    %c0 = arith.constant 0 : index
    %c0_0 = arith.constant 0 : index
    %0 = vector.load %arg2[%c0, %c0_0] : memref<512x64xf32, #tpu.memory_space<vmem>>, vector<512x64xf32>
    %c0_1 = arith.constant 0 : index
    %c0_2 = arith.constant 0 : index
    %1 = vector.load %arg1[%c0_1, %c0_2] : memref<18x512xf32, #tpu.memory_space<vmem>>, vector<18x512xf32>
    %cst = arith.constant dense<0.000000e+00> : vector<18x64xf32>
    %2 = tpu.matmul %1, %0, %cst {dimension_numbers = #tpu.dot_dimension_numbers<[1], [0], [0], [1], [0, 0, 1, 1], [], []>} : vector<18x512xf32>, vector<512x64xf32>, vector<18x64xf32> -> vector<18x64xf32>
    %c0_3 = arith.constant 0 : index
    %c0_4 = arith.constant 0 : index
    %3 = vector.load %arg3[%c0_3, %c0_4] : memref<1x64xf32, #tpu.memory_space<vmem>>, vector<1x64xf32>
    %4 = vector.broadcast %3 : vector<1x64xf32> to vector<18x64xf32>
    %5 = arith.addf %2, %4 : vector<18x64xf32>
    %cst_5 = arith.constant 0.000000e+00 : f32
    %6 = vector.broadcast %cst_5 : f32 to vector<18x64xf32>
    %7 = arith.maximumf %5, %6 : vector<18x64xf32>
    %c0_6 = arith.constant 0 : index
    %c0_7 = arith.constant 0 : index
    %8 = vector.load %arg4[%c0_6, %c0_7] : memref<18x64xf32, #tpu.memory_space<vmem>>, vector<18x64xf32>
    tpu.vector_store %arg4[%c0_6, %c0_7], %7 {strides = array<i32>} : memref<18x64xf32, #tpu.memory_space<vmem>>, vector<18x64xf32>,
    return
  }
  func.func @transform_0(%arg0: i32) -> (i32, i32) {
    %c0_i32 = arith.constant 0 : i32
    %c0_i32_0 = arith.constant 0 : i32
    return %arg0, %c0_i32 : i32, i32
  }
  func.func @transform_1(%arg0: i32) -> (i32, i32) {
    %c0_i32 = arith.constant 0 : i32
    %c0_i32_0 = arith.constant 0 : i32
    %c0_i32_1 = arith.constant 0 : i32
    return %c0_i32, %c0_i32_0 : i32, i32
  }
  func.func @transform_2(%arg0: i32) -> (i32, i32) {
    %c0_i32 = arith.constant 0 : i32
    %c0_i32_0 = arith.constant 0 : i32
    %c0_i32_1 = arith.constant 0 : i32
    return %c0_i32, %c0_i32_0 : i32, i32
  }
  func.func @transform_3(%arg0: i32) -> (i32, i32) {
    %c0_i32 = arith.constant 0 : i32
    %c0_i32_0 = arith.constant 0 : i32
    return %arg0, %c0_i32 : i32, i32
  }
}

module attributes {stable_mosaic.version = 11 : i64} {
  func.func @_linear_kernel(%arg0: i32, %arg1: memref<2x576xf32, #tpu.memory_space<vmem>>, %arg2: memref<576x64xf32, #tpu.memory_space<vmem>>, %arg3: memref<1x64xf32, #tpu.memory_space<vmem>>, %arg4: memref<2x64xf32, #tpu.memory_space<vmem>>) attributes {dimension_semantics = [#tpu.dimension_semantics<parallel>], iteration_bounds = array<i64: 1>, scalar_prefetch = 0 : i64, scratch_operands = 0 : i64, tpu.core_type = #tpu.core_type<tc>, window_params = [{transform_indices = @transform_0, window_bounds = array<i64: 2, 576>}, {pipeline_mode = #tpu.pipeline_mode<synchronous>, transform_indices = @transform_1, window_bounds = array<i64: 576, 64>}, {pipeline_mode = #tpu.pipeline_mode<synchronous>, transform_indices = @transform_2, window_bounds = array<i64: 1, 64>}, {transform_indices = @transform_3, window_bounds = array<i64: 2, 64>}]} {
    %c0 = arith.constant 0 : index
    %c0_0 = arith.constant 0 : index
    %0 = vector.load %arg2[%c0, %c0_0] : memref<576x64xf32, #tpu.memory_space<vmem>>, vector<576x64xf32>
    %c0_1 = arith.constant 0 : index
    %c0_2 = arith.constant 0 : index
    %1 = vector.load %arg1[%c0_1, %c0_2] : memref<2x576xf32, #tpu.memory_space<vmem>>, vector<2x576xf32>
    %cst = arith.constant dense<0.000000e+00> : vector<2x64xf32>
    %2 = tpu.matmul %1, %0, %cst {dimension_numbers = #tpu.dot_dimension_numbers<[1], [0], [0], [1], [0, 0, 1, 1], [], []>} : vector<2x576xf32>, vector<576x64xf32>, vector<2x64xf32> -> vector<2x64xf32>
    %c0_3 = arith.constant 0 : index
    %c0_4 = arith.constant 0 : index
    %3 = vector.load %arg3[%c0_3, %c0_4] : memref<1x64xf32, #tpu.memory_space<vmem>>, vector<1x64xf32>
    %4 = vector.broadcast %3 : vector<1x64xf32> to vector<2x64xf32>
    %5 = arith.addf %2, %4 : vector<2x64xf32>
    %cst_5 = arith.constant 0.000000e+00 : f32
    %6 = vector.broadcast %cst_5 : f32 to vector<2x64xf32>
    %7 = arith.maximumf %5, %6 : vector<2x64xf32>
    %c0_6 = arith.constant 0 : index
    %c0_7 = arith.constant 0 : index
    %8 = vector.load %arg4[%c0_6, %c0_7] : memref<2x64xf32, #tpu.memory_space<vmem>>, vector<2x64xf32>
    tpu.vector_store %arg4[%c0_6, %c0_7], %7 {strides = array<i32>} : memref<2x64xf32, #tpu.memory_space<vmem>>, vector<2x64xf32>,
    return
  }
  func.func @transform_0(%arg0: i32) -> (i32, i32) {
    %c0_i32 = arith.constant 0 : i32
    %c0_i32_0 = arith.constant 0 : i32
    return %arg0, %c0_i32 : i32, i32
  }
  func.func @transform_1(%arg0: i32) -> (i32, i32) {
    %c0_i32 = arith.constant 0 : i32
    %c0_i32_0 = arith.constant 0 : i32
    %c0_i32_1 = arith.constant 0 : i32
    return %c0_i32, %c0_i32_0 : i32, i32
  }
  func.func @transform_2(%arg0: i32) -> (i32, i32) {
    %c0_i32 = arith.constant 0 : i32
    %c0_i32_0 = arith.constant 0 : i32
    %c0_i32_1 = arith.constant 0 : i32
    return %c0_i32, %c0_i32_0 : i32, i32
  }
  func.func @transform_3(%arg0: i32) -> (i32, i32) {
    %c0_i32 = arith.constant 0 : i32
    %c0_i32_0 = arith.constant 0 : i32
    return %arg0, %c0_i32 : i32, i32
  }
}

module attributes {stable_mosaic.version = 11 : i64} {
  func.func @_actor_critic_head_kernel(%arg0: i32, %arg1: memref<2x64xf32, #tpu.memory_space<vmem>>, %arg2: memref<64x256xf32, #tpu.memory_space<vmem>>, %arg3: memref<1x256xf32, #tpu.memory_space<vmem>>, %arg4: memref<256x128xf32, #tpu.memory_space<vmem>>, %arg5: memref<1x128xf32, #tpu.memory_space<vmem>>, %arg6: memref<2x128xf32, #tpu.memory_space<vmem>>) attributes {dimension_semantics = [#tpu.dimension_semantics<parallel>], iteration_bounds = array<i64: 1>, scalar_prefetch = 0 : i64, scratch_operands = 0 : i64, tpu.core_type = #tpu.core_type<tc>, window_params = [{transform_indices = @transform_0, window_bounds = array<i64: 2, 64>}, {pipeline_mode = #tpu.pipeline_mode<synchronous>, transform_indices = @transform_1, window_bounds = array<i64: 64, 256>}, {pipeline_mode = #tpu.pipeline_mode<synchronous>, transform_indices = @transform_2, window_bounds = array<i64: 1, 256>}, {pipeline_mode = #tpu.pipeline_mode<synchronous>, transform_indices = @transform_3, window_bounds = array<i64: 256, 128>}, {pipeline_mode = #tpu.pipeline_mode<synchronous>, transform_indices = @transform_4, window_bounds = array<i64: 1, 128>}, {transform_indices = @transform_5, window_bounds = array<i64: 2, 128>}]} {
    %c0 = arith.constant 0 : index
    %c0_0 = arith.constant 0 : index
    %0 = vector.load %arg2[%c0, %c0_0] : memref<64x256xf32, #tpu.memory_space<vmem>>, vector<64x256xf32>
    %c0_1 = arith.constant 0 : index
    %c0_2 = arith.constant 0 : index
    %1 = vector.load %arg1[%c0_1, %c0_2] : memref<2x64xf32, #tpu.memory_space<vmem>>, vector<2x64xf32>
    %cst = arith.constant dense<0.000000e+00> : vector<2x256xf32>
    %2 = tpu.matmul %1, %0, %cst {dimension_numbers = #tpu.dot_dimension_numbers<[1], [0], [0], [1], [0, 0, 1, 1], [], []>} : vector<2x64xf32>, vector<64x256xf32>, vector<2x256xf32> -> vector<2x256xf32>
    %c0_3 = arith.constant 0 : index
    %c0_4 = arith.constant 0 : index
    %3 = vector.load %arg3[%c0_3, %c0_4] : memref<1x256xf32, #tpu.memory_space<vmem>>, vector<1x256xf32>
    %4 = vector.broadcast %3 : vector<1x256xf32> to vector<2x256xf32>
    %5 = arith.addf %2, %4 : vector<2x256xf32>
    %cst_5 = arith.constant 0.000000e+00 : f32
    %6 = vector.broadcast %cst_5 : f32 to vector<2x256xf32>
    %7 = arith.maximumf %5, %6 : vector<2x256xf32>
    %c0_6 = arith.constant 0 : index
    %c0_7 = arith.constant 0 : index
    %8 = vector.load %arg4[%c0_6, %c0_7] : memref<256x128xf32, #tpu.memory_space<vmem>>, vector<256x128xf32>
    %cst_8 = arith.constant dense<0.000000e+00> : vector<2x128xf32>
    %9 = tpu.matmul %7, %8, %cst_8 {dimension_numbers = #tpu.dot_dimension_numbers<[1], [0], [0], [1], [0, 0, 1, 1], [], []>} : vector<2x256xf32>, vector<256x128xf32>, vector<2x128xf32> -> vector<2x128xf32>
    %c0_9 = arith.constant 0 : index
    %c0_10 = arith.constant 0 : index
    %10 = vector.load %arg5[%c0_9, %c0_10] : memref<1x128xf32, #tpu.memory_space<vmem>>, vector<1x128xf32>
    %11 = vector.broadcast %10 : vector<1x128xf32> to vector<2x128xf32>
    %12 = arith.addf %9, %11 : vector<2x128xf32>
    %c0_11 = arith.constant 0 : index
    %c0_12 = arith.constant 0 : index
    %13 = vector.load %arg6[%c0_11, %c0_12] : memref<2x128xf32, #tpu.memory_space<vmem>>, vector<2x128xf32>
    tpu.vector_store %arg6[%c0_11, %c0_12], %12 {strides = array<i32>} : memref<2x128xf32, #tpu.memory_space<vmem>>, vector<2x128xf32>,
    return
  }
  func.func @transform_0(%arg0: i32) -> (i32, i32) {
    %c0_i32 = arith.constant 0 : i32
    %c0_i32_0 = arith.constant 0 : i32
    return %arg0, %c0_i32 : i32, i32
  }
  func.func @transform_1(%arg0: i32) -> (i32, i32) {
    %c0_i32 = arith.constant 0 : i32
    %c0_i32_0 = arith.constant 0 : i32
    %c0_i32_1 = arith.constant 0 : i32
    return %c0_i32, %c0_i32_0 : i32, i32
  }
  func.func @transform_2(%arg0: i32) -> (i32, i32) {
    %c0_i32 = arith.constant 0 : i32
    %c0_i32_0 = arith.constant 0 : i32
    %c0_i32_1 = arith.constant 0 : i32
    return %c0_i32, %c0_i32_0 : i32, i32
  }
  func.func @transform_3(%arg0: i32) -> (i32, i32) {
    %c0_i32 = arith.constant 0 : i32
    %c0_i32_0 = arith.constant 0 : i32
    %c0_i32_1 = arith.constant 0 : i32
    return %c0_i32, %c0_i32_0 : i32, i32
  }
  func.func @transform_4(%arg0: i32) -> (i32, i32) {
    %c0_i32 = arith.constant 0 : i32
    %c0_i32_0 = arith.constant 0 : i32
    %c0_i32_1 = arith.constant 0 : i32
    return %c0_i32, %c0_i32_0 : i32, i32
  }
  func.func @transform_5(%arg0: i32) -> (i32, i32) {
    %c0_i32 = arith.constant 0 : i32
    %c0_i32_0 = arith.constant 0 : i32
    return %arg0, %c0_i32 : i32, i32
  }
}

</mosaic_0001>

<llo_original>
// kernel: actor_critic_forward.6
$region0: #{actor_critic_forward.6}
  #allocation0 [shape = 'u32[]', space=smem, size = 0x4, offset = 0x4, fixed_abs, tag = 'smem constant byte address 0x4 - core index']
  #allocation1 [shape = 'u32[144,128]{1,0:T(1,128)}', space=vmem, size = 0x12000, scoped, tag = 'internal scratch']
  %s0 = inlined_call_operand.vmem [shape: f32[18,512], index: 0, kind: input, shape index: {}]
  %s1 = inlined_call_operand.vmem [shape: f32[512,64], index: 1, kind: input, shape index: {}]
  %s2 = inlined_call_operand.vmem [shape: f32[1,64], index: 2, kind: input, shape index: {}]
  %s3 = inlined_call_operand.vmem [shape: f32[18,64], index: 3, kind: output, shape index: {}]
  %s4 = sld [smem:[#allocation0]]
  $region22: #{actor_critic_forward.6} parent=0
    _
  %s6 = ssub.s32 1, %s4
  %s7 = scalar_select 0, %s6, %s4
  // Predicated region
  $region2: #{actor_critic_forward.6} parent=0 // pred_check
    _
  $region3: #{actor_critic_forward.6} parent=0 // pred_check_branch
    %9 = sbr.rel (0) target = $region5
  $region4: #{actor_critic_forward.6} parent=0 // pred_region
    _
  $region5: #{actor_critic_forward.6} parent=0 // pred_fallthru
    _
  // Predicated region
  $region6: #{actor_critic_forward.6} parent=0 // pred_check
    _
  $region7: #{actor_critic_forward.6} parent=0 // pred_check_branch
    %11 = sbr.rel (0) target = $region9
  $region8: #{actor_critic_forward.6} parent=0 // pred_region
    _
  $region9: #{actor_critic_forward.6} parent=0 // pred_fallthru
    _
  // Predicated region
  $region10: #{actor_critic_forward.6} parent=0 // pred_check
    _
  $region11: #{actor_critic_forward.6} parent=0 // pred_check_branch
    %13 = sbr.rel (0) target = $region13
  $region12: #{actor_critic_forward.6} parent=0 // pred_region
    _
  $region13: #{actor_critic_forward.6} parent=0 // pred_fallthru
    _
  %v14 = vld [vmem:[%s1] sm:$0xff]
  %v15 = vld [vmem:[%s1 + $0x8] sm:$0xff]
  %v16 = vld [vmem:[%s1 + $0x10] sm:$0xff]
  %v17 = vld [vmem:[%s1 + $0x18] sm:$0xff]
  %v18 = vld [vmem:[%s1 + $0x20] sm:$0xff]
  %v19 = vld [vmem:[%s1 + $0x28] sm:$0xff]
  %v20 = vld [vmem:[%s1 + $0x30] sm:$0xff]
  %v21 = vld [vmem:[%s1 + $0x38] sm:$0xff]
  %v22 = vld [vmem:[%s1 + $0x40] sm:$0xff]
  %v23 = vld [vmem:[%s1 + $0x48] sm:$0xff]
  %v24 = vld [vmem:[%s1 + $0x50] sm:$0xff]
  %v25 = vld [vmem:[%s1 + $0x58] sm:$0xff]
  %v26 = vld [vmem:[%s1 + $0x60] sm:$0xff]
  %v27 = vld [vmem:[%s1 + $0x68] sm:$0xff]
  %v28 = vld [vmem:[%s1 + $0x70] sm:$0xff]
  %v29 = vld [vmem:[%s1 + $0x78] sm:$0xff]
  %v30 = vld [vmem:[%s1 + $0x80] sm:$0xff]
  %v31 = vld [vmem:[%s1 + $0x88] sm:$0xff]
  %v32 = vld [vmem:[%s1 + $0x90] sm:$0xff]
  %v33 = vld [vmem:[%s1 + $0x98] sm:$0xff]
  %v34 = vld [vmem:[%s1 + $0xa0] sm:$0xff]
  %v35 = vld [vmem:[%s1 + $0xa8] sm:$0xff]
  %v36 = vld [vmem:[%s1 + $0xb0] sm:$0xff]
  %v37 = vld [vmem:[%s1 + $0xb8] sm:$0xff]
  %v38 = vld [vmem:[%s1 + $0xc0] sm:$0xff]
  %v39 = vld [vmem:[%s1 + $0xc8] sm:$0xff]
  %v40 = vld [vmem:[%s1 + $0xd0] sm:$0xff]
  %v41 = vld [vmem:[%s1 + $0xd8] sm:$0xff]
  %v42 = vld [vmem:[%s1 + $0xe0] sm:$0xff]
  %v43 = vld [vmem:[%s1 + $0xe8] sm:$0xff]
  %v44 = vld [vmem:[%s1 + $0xf0] sm:$0xff]
  %v45 = vld [vmem:[%s1 + $0xf8] sm:$0xff]
  %v46 = vld [vmem:[%s1 + $0x100] sm:$0xff]
  %v47 = vld [vmem:[%s1 + $0x108] sm:$0xff]
  %v48 = vld [vmem:[%s1 + $0x110] sm:$0xff]
  %v49 = vld [vmem:[%s1 + $0x118] sm:$0xff]
  %v50 = vld [vmem:[%s1 + $0x120] sm:$0xff]
  %v51 = vld [vmem:[%s1 + $0x128] sm:$0xff]
  %v52 = vld [vmem:[%s1 + $0x130] sm:$0xff]
  %v53 = vld [vmem:[%s1 + $0x138] sm:$0xff]
  %v54 = vld [vmem:[%s1 + $0x140] sm:$0xff]
  %v55 = vld [vmem:[%s1 + $0x148] sm:$0xff]
  %v56 = vld [vmem:[%s1 + $0x150] sm:$0xff]
  %v57 = vld [vmem:[%s1 + $0x158] sm:$0xff]
  %v58 = vld [vmem:[%s1 + $0x160] sm:$0xff]
  %v59 = vld [vmem:[%s1 + $0x168] sm:$0xff]
  %v60 = vld [vmem:[%s1 + $0x170] sm:$0xff]
  %v61 = vld [vmem:[%s1 + $0x178] sm:$0xff]
  %v62 = vld [vmem:[%s1 + $0x180] sm:$0xff]
  %v63 = vld [vmem:[%s1 + $0x188] sm:$0xff]
  %v64 = vld [vmem:[%s1 + $0x190] sm:$0xff]
  %v65 = vld [vmem:[%s1 + $0x198] sm:$0xff]
  %v66 = vld [vmem:[%s1 + $0x1a0] sm:$0xff]
  %v67 = vld [vmem:[%s1 + $0x1a8] sm:$0xff]
  %v68 = vld [vmem:[%s1 + $0x1b0] sm:$0xff]
  %v69 = vld [vmem:[%s1 + $0x1b8] sm:$0xff]
  %v70 = vld [vmem:[%s1 + $0x1c0] sm:$0xff]
  %v71 = vld [vmem:[%s1 + $0x1c8] sm:$0xff]
  %v72 = vld [vmem:[%s1 + $0x1d0] sm:$0xff]
  %v73 = vld [vmem:[%s1 + $0x1d8] sm:$0xff]
  %v74 = vld [vmem:[%s1 + $0x1e0] sm:$0xff]
  %v75 = vld [vmem:[%s1 + $0x1e8] sm:$0xff]
  %v76 = vld [vmem:[%s1 + $0x1f0] sm:$0xff]
  %v77 = vld [vmem:[%s1 + $0x1f8] sm:$0xff]
  %v78 = vld [vmem:[%s0] sm:$0xff]
  %v79 = vld [vmem:[%s0 + $0x8] sm:$0xff]
  %v80 = vld [vmem:[%s0 + $0x10] sm:$0xff]
  %v81 = vld [vmem:[%s0 + $0x18] sm:$0xff]
  %v82 = vld [vmem:[%s0 + $0x20] sm:$0xff]
  %v83 = vld [vmem:[%s0 + $0x28] sm:$0xff]
  %v84 = vld [vmem:[%s0 + $0x30] sm:$0xff]
  %v85 = vld [vmem:[%s0 + $0x38] sm:$0xff]
  %v86 = vld [vmem:[%s0 + $0x40] sm:$0x3]
  %v87 = vld [vmem:[%s0 + $0x48] sm:$0x3]
  %v88 = vld [vmem:[%s0 + $0x50] sm:$0x3]
  %v89 = vld [vmem:[%s0 + $0x58] sm:$0x3]
  %v90 = vld [vmem:[%s2] sm:$0x1]
  %v92 = vlaneseq
  %v93 = vshrl.u32 %v92, 7
  %v94 = vsub.s32 0, %v93
  %v95 = vrot.slane %v90, %v94
  %97 = vmatprep.subr.mxu0 0.0
  %98 = vmatpush1.msra.mxu0 %v29
  %99 = vmatprep.subr.mxu0 0.0
  %100 = vmatpush1.msra.mxu0 %v28
  %101 = vmatprep.subr.mxu0 0.0
  %102 = vmatpush1.msra.mxu0 %v27
  %103 = vmatprep.subr.mxu0 0.0
  %104 = vmatpush1.msra.mxu0 %v26
  %105 = vmatprep.subr.mxu0 0.0
  %106 = vmatpush1.msra.mxu0 %v25
  %107 = vmatprep.subr.mxu0 0.0
  %108 = vmatpush1.msra.mxu0 %v24
  %109 = vmatprep.subr.mxu0 0.0
  %110 = vmatpush1.msra.mxu0 %v23
  %111 = vmatprep.subr.mxu0 0.0
  %112 = vmatpush1.msra.mxu0 %v22
  %113 = vmatprep.subr.mxu0 0.0
  %114 = vmatpush1.msra.mxu0 %v21
  %115 = vmatprep.subr.mxu0 0.0
  %116 = vmatpush1.msra.mxu0 %v20
  %117 = vmatprep.subr.mxu0 0.0
  %118 = vmatpush1.msra.mxu0 %v19
  %119 = vmatprep.subr.mxu0 0.0
  %120 = vmatpush1.msra.mxu0 %v18
  %121 = vmatprep.subr.mxu0 0.0
  %122 = vmatpush1.msra.mxu0 %v17
  %123 = vmatprep.subr.mxu0 0.0
  %124 = vmatpush1.msra.mxu0 %v16
  %125 = vmatprep.subr.mxu0 0.0
  %126 = vmatpush1.msra.mxu0 %v15
  %127 = vmatprep.subr.mxu0 0.0
  %128 = vmatpush1.msra.mxu0 %v14
  %129 = vmatprep.subr.mxu0 0.0
  %130 = vmatpush2.msra.mxu0 %v45
  %131 = vmatprep.subr.mxu0 0.0
  %132 = vmatpush2.msra.mxu0 %v44
  %133 = vmatprep.subr.mxu0 0.0
  %134 = vmatpush2.msra.mxu0 %v43
  %135 = vmatprep.subr.mxu0 0.0
  %136 = vmatpush2.msra.mxu0 %v42
  %137 = vmatprep.subr.mxu0 0.0
  %138 = vmatpush2.msra.mxu0 %v41
  %139 = vmatprep.subr.mxu0 0.0
  %140 = vmatpush2.msra.mxu0 %v40
  %141 = vmatprep.subr.mxu0 0.0
  %142 = vmatpush2.msra.mxu0 %v39
  %143 = vmatprep.subr.mxu0 0.0
  %144 = vmatpush2.msra.mxu0 %v38
  %145 = vmatprep.subr.mxu0 0.0
  %146 = vmatpush2.msra.mxu0 %v37
  %147 = vmatprep.subr.mxu0 0.0
  %148 = vmatpush2.msra.mxu0 %v36
  %149 = vmatprep.subr.mxu0 0.0
  %150 = vmatpush2.msra.mxu0 %v35
  %151 = vmatprep.subr.mxu0 0.0
  %152 = vmatpush2.msra.mxu0 %v34
  %153 = vmatprep.subr.mxu0 0.0
  %154 = vmatpush2.msra.mxu0 %v33
  %155 = vmatprep.subr.mxu0 0.0
  %156 = vmatpush2.msra.mxu0 %v32
  %157 = vmatprep.subr.mxu0 0.0
  %158 = vmatpush2.msra.mxu0 %v31
  %159 = vmatprep.subr.mxu0 0.0
  %160 = vmatpush2.msra.mxu0 %v30
  %161 = vmatprep.mubr.f32.mxu0 %v79
  %162 = vmatmul.mubr.f32.gmra.mxu0 %v78
  %v163 = vpop.f32.mrf.mxu0
  %v164 = vadd.f32 %v95, %v163
  %v165 = vpop.f32.mrf.mxu0
  %166 = vmatprep.mubr.f32.mxu0 %v83
  %167 = vmatmul.mubr.f32.gmra.mxu0 %v82
  %v168 = vpop.f32.mrf.mxu0
  %v169 = vadd.f32 %v95, %v168
  %v170 = vpop.f32.mrf.mxu0
  %171 = vmatprep.mubr.f32.mxu0 %v87
  %172 = vmatmul.mubr.f32.gmra.mxu0 %v86
  %v173 = vpop.f32.mrf.mxu0
  %v174 = vadd.f32 %v95, %v173
  %v175 = vpop.f32.mrf.mxu0
  %176 = vdwg.mxu0
  %177 = vmatprep.subr.mxu0 0.0
  %178 = vmatpush1.msra.mxu0 %v61
  %179 = vmatprep.subr.mxu0 0.0
  %180 = vmatpush1.msra.mxu0 %v60
  %181 = vmatprep.subr.mxu0 0.0
  %182 = vmatpush1.msra.mxu0 %v59
  %183 = vmatprep.subr.mxu0 0.0
  %184 = vmatpush1.msra.mxu0 %v58
  %185 = vmatprep.subr.mxu0 0.0
  %186 = vmatpush1.msra.mxu0 %v57
  %187 = vmatprep.subr.mxu0 0.0
  %188 = vmatpush1.msra.mxu0 %v56
  %189 = vmatprep.subr.mxu0 0.0
  %190 = vmatpush1.msra.mxu0 %v55
  %191 = vmatprep.subr.mxu0 0.0
  %192 = vmatpush1.msra.mxu0 %v54
  %193 = vmatprep.subr.mxu0 0.0
  %194 = vmatpush1.msra.mxu0 %v53
  %195 = vmatprep.subr.mxu0 0.0
  %196 = vmatpush1.msra.mxu0 %v52
  %197 = vmatprep.subr.mxu0 0.0
  %198 = vmatpush1.msra.mxu0 %v51
  %199 = vmatprep.subr.mxu0 0.0
  %200 = vmatpush1.msra.mxu0 %v50
  %201 = vmatprep.subr.mxu0 0.0
  %202 = vmatpush1.msra.mxu0 %v49
  %203 = vmatprep.subr.mxu0 0.0
  %204 = vmatpush1.msra.mxu0 %v48
  %205 = vmatprep.subr.mxu0 0.0
  %206 = vmatpush1.msra.mxu0 %v47
  %207 = vmatprep.subr.mxu0 0.0
  %208 = vmatpush1.msra.mxu0 %v46
  %209 = vmatprep.subr.mxu0 0.0
  %210 = vmatpush2.msra.mxu0 %v77
  %211 = vmatprep.subr.mxu0 0.0
  %212 = vmatpush2.msra.mxu0 %v76
  %213 = vmatprep.subr.mxu0 0.0
  %214 = vmatpush2.msra.mxu0 %v75
  %215 = vmatprep.subr.mxu0 0.0
  %216 = vmatpush2.msra.mxu0 %v74
  %217 = vmatprep.subr.mxu0 0.0
  %218 = vmatpush2.msra.mxu0 %v73
  %219 = vmatprep.subr.mxu0 0.0
  %220 = vmatpush2.msra.mxu0 %v72
  %221 = vmatprep.subr.mxu0 0.0
  %222 = vmatpush2.msra.mxu0 %v71
  %223 = vmatprep.subr.mxu0 0.0
  %224 = vmatpush2.msra.mxu0 %v70
  %225 = vmatprep.subr.mxu0 0.0
  %226 = vmatpush2.msra.mxu0 %v69
  %227 = vmatprep.subr.mxu0 0.0
  %228 = vmatpush2.msra.mxu0 %v68
  %229 = vmatprep.subr.mxu0 0.0
  %230 = vmatpush2.msra.mxu0 %v67
  %231 = vmatprep.subr.mxu0 0.0
  %232 = vmatpush2.msra.mxu0 %v66
  %233 = vmatprep.subr.mxu0 0.0
  %234 = vmatpush2.msra.mxu0 %v65
  %235 = vmatprep.subr.mxu0 0.0
  %236 = vmatpush2.msra.mxu0 %v64
  %237 = vmatprep.subr.mxu0 0.0
  %238 = vmatpush2.msra.mxu0 %v63
  %239 = vmatprep.subr.mxu0 0.0
  %240 = vmatpush2.msra.mxu0 %v62
  %241 = vmatprep.mubr.f32.mxu0 %v81
  %242 = vmatmul.mubr.f32.gmra.mxu0 %v80
  %v243 = vpop.f32.mrf.mxu0
  %v244 = vadd.f32 %v164, %v243
  %v245 = vpop.f32.mrf.mxu0
  %246 = vmatprep.mubr.f32.mxu0 %v85
  %247 = vmatmul.mubr.f32.gmra.mxu0 %v84
  %v248 = vpop.f32.mrf.mxu0
  %v249 = vadd.f32 %v169, %v248
  %v250 = vpop.f32.mrf.mxu0
  %251 = vmatprep.mubr.f32.mxu0 %v89
  %252 = vmatmul.mubr.f32.gmra.mxu0 %v88
  %v253 = vpop.f32.mrf.mxu0
  %v254 = vadd.f32 %v174, %v253
  %v255 = vpop.f32.mrf.mxu0
  %256 = vdwg.mxu0
  %v257 = vmax.f32 %v244, 0.0
  %v258 = vmax.f32 %v249, 0.0
  %v259 = vmax.f32 %v254, 0.0
  %vm260 = vcmask 523264
  %261 = vst.msk [vmem:[%s3] sm:$0xff] %vm260, %v257
  %262 = vst.msk [vmem:[%s3 + $0x8] sm:$0xff] %vm260, %v258
  %vm263 = vcmask 517120
  %264 = vst.msk [vmem:[%s3 + $0x10] sm:$0x3] %vm263, %v259
  // Predicated region
  $region14: #{actor_critic_forward.6} parent=0 // pred_check
    _
  $region15: #{actor_critic_forward.6} parent=0 // pred_check_branch
    %266 = sbr.rel (0) target = $region17
  $region16: #{actor_critic_forward.6} parent=0 // pred_region
    _
  $region17: #{actor_critic_forward.6} parent=0 // pred_fallthru
    _
  // Predicated region
  $region18: #{actor_critic_forward.6} parent=0 // pred_check
    _
  $region19: #{actor_critic_forward.6} parent=0 // pred_check_branch
    %268 = sbr.rel (0) target = $region21
  $region20: #{actor_critic_forward.6} parent=0 // pred_region
    _
  $region21: #{actor_critic_forward.6} parent=0 // pred_fallthru
    _

// kernel: actor_critic_forward.5
$region0: #{actor_critic_forward.5}
  #allocation0 [shape = 'u32[]', space=smem, size = 0x4, offset = 0x4, fixed_abs, tag = 'smem constant byte address 0x4 - core index']
  #allocation1 [shape = 'u32[144,128]{1,0:T(1,128)}', space=vmem, size = 0x12000, scoped, tag = 'internal scratch']
  %s0 = inlined_call_operand.vmem [shape: f32[128,256], index: 0, kind: input, shape index: {}]
  %s1 = inlined_call_operand.vmem [shape: f32[256,32], index: 1, kind: input, shape index: {}]
  %s2 = inlined_call_operand.vmem [shape: f32[1,32], index: 2, kind: input, shape index: {}]
  %s3 = inlined_call_operand.vmem [shape: f32[128,32], index: 3, kind: output, shape index: {}]
  %s4 = sld [smem:[#allocation0]]
  $region45: #{actor_critic_forward.5} parent=0
    _
  %s6 = ssub.s32 1, %s4
  %s7 = scalar_select 0, %s6, %s4
  loop: start=0, step=1, limit=4
  $region2: #{actor_critic_forward.5} parent=0 // loop_pre_header
    _
  $region3: #{actor_critic_forward.5} parent=0 // loop_header
    %s9 = sphi 0, %s13
    %p10 = scmp.ge.s32.totalorder %s9, 4
    %s19 = sphi 0, %s21
    %s22 = sphi 0, %s19
    %s23 = sphi 0, %s22
    %s39 = sphi 0, %s23
    %s43 = sphi 0, %s43
    %s45 = sphi 0, %s43
    %s46 = sphi 0, %s45
    %s60 = sphi 0, %s46
    %s64 = sphi 0, %s64
    %s66 = sphi 0, %s64
    %s67 = sphi 0, %s66
    %s81 = sphi 0, %s67
    %s87 = sphi 0, %s89
    %s90 = sphi 0, %s87
    %s91 = sphi 0, %s90
    %s107 = sphi 0, %s91
  $region4: #{actor_critic_forward.5} parent=0 // loop_header_branch
    %12 = sbr.rel (%p10) target = $region8
  $region5: #{actor_critic_forward.5} parent=0 // loop_body
    %s14 = ssub.s32 %s9, 1
    %s15 = ssub.s32 %s9, 2
    %s16 = sadd.s32 %s9, 1
    %s17 = ssub.s32 %s9, %s16
    %p18 = scmp.eq.s32.totalorder %s17, 0
    %s20 = sadd.s32 %s19, 1
    %s21 = scalar_select %p18, %s19, %s20
    %p24 = pneg %p18
    %p25 = scmp.eq.s32.totalorder %s9, 1
    %p26 = por %p24, %p25
    %p27 = scmp.ne.s32.totalorder %s19, %s22
    %p28 = scmp.eq.s32.totalorder %s9, 0
    %p29 = por %p27, %p28
    %p30 = scmp.ne.s32.totalorder %s19, %s22
    %p31 = scmp.eq.s32.totalorder %s14, 1
    %p32 = por %p30, %p31
    %p33 = scmp.ne.s32.totalorder %s22, %s23
    %p34 = scmp.eq.s32.totalorder %s14, 0
    %p35 = por %p33, %p34
    %p36 = scmp.ne.s32.totalorder %s22, %s23
    %p37 = scmp.eq.s32.totalorder %s15, 1
    %p38 = por %p36, %p37
    %p40 = scmp.ne.s32.totalorder %s23, %s39
    %p41 = scmp.eq.s32.totalorder %s15, 0
    %p42 = por %p40, %p41
    %s44 = sadd.s32 %s43, 1
    %p47 = scmp.eq.s32.totalorder %s9, 1
    %p48 = scmp.ne.s32.totalorder %s43, %s45
    %p49 = scmp.eq.s32.totalorder %s9, 0
    %p50 = por %p48, %p49
    %p51 = scmp.ne.s32.totalorder %s43, %s45
    %p52 = scmp.eq.s32.totalorder %s14, 1
    %p53 = por %p51, %p52
    %p54 = scmp.ne.s32.totalorder %s45, %s46
    %p55 = scmp.eq.s32.totalorder %s14, 0
    %p56 = por %p54, %p55
    %p57 = scmp.ne.s32.totalorder %s45, %s46
    %p58 = scmp.eq.s32.totalorder %s15, 1
    %p59 = por %p57, %p58
    %p61 = scmp.ne.s32.totalorder %s46, %s60
    %p62 = scmp.eq.s32.totalorder %s15, 0
    %p63 = por %p61, %p62
    %s65 = sadd.s32 %s64, 1
    %p68 = scmp.eq.s32.totalorder %s9, 1
    %p69 = scmp.ne.s32.totalorder %s64, %s66
    %p70 = scmp.eq.s32.totalorder %s9, 0
    %p71 = por %p69, %p70
    %p72 = scmp.ne.s32.totalorder %s64, %s66
    %p73 = scmp.eq.s32.totalorder %s14, 1
    %p74 = por %p72, %p73
    %p75 = scmp.ne.s32.totalorder %s66, %s67
    %p76 = scmp.eq.s32.totalorder %s14, 0
    %p77 = por %p75, %p76
    %p78 = scmp.ne.s32.totalorder %s66, %s67
    %p79 = scmp.eq.s32.totalorder %s15, 1
    %p80 = por %p78, %p79
    %p82 = scmp.ne.s32.totalorder %s67, %s81
    %p83 = scmp.eq.s32.totalorder %s15, 0
    %p84 = por %p82, %p83
    %s85 = ssub.s32 %s9, %s16
    %p86 = scmp.eq.s32.totalorder %s85, 0
    %s88 = sadd.s32 %s87, 1
    %s89 = scalar_select %p86, %s87, %s88
    %p92 = pneg %p86
    %p93 = scmp.eq.s32.totalorder %s9, 1
    %p94 = por %p92, %p93
    %p95 = scmp.ne.s32.totalorder %s87, %s90
    %p96 = scmp.eq.s32.totalorder %s9, 0
    %p97 = por %p95, %p96
    %p98 = scmp.ne.s32.totalorder %s87, %s90
    %p99 = scmp.eq.s32.totalorder %s14, 1
    %p100 = por %p98, %p99
    %p101 = scmp.ne.s32.totalorder %s90, %s91
    %p102 = scmp.eq.s32.totalorder %s14, 0
    %p103 = por %p101, %p102
    %p104 = scmp.ne.s32.totalorder %s90, %s91
    %p105 = scmp.eq.s32.totalorder %s15, 1
    %p106 = por %p104, %p105
    %p108 = scmp.ne.s32.totalorder %s91, %s107
    %p109 = scmp.eq.s32.totalorder %s15, 0
    %p110 = por %p108, %p109
    %p111 = scmp.le.s32.totalorder 1, %s9
    %p112 = scmp.lt.s32.totalorder %s9, 3
    %p113 = pnand %p111, %p112
    %p114 = pneg %p113
    // Predicated region
    $region9: #{actor_critic_forward.5} parent=5 // pred_check
      _
    $region10: #{actor_critic_forward.5} parent=5 // pred_check_branch
      %116 = sbr.rel (%p113) target = $region12
    $region11: #{actor_critic_forward.5} parent=5 // pred_region
      %s117 = ssub.s32 %s9, 1
      // Predicated region
      $region13: #{actor_critic_forward.5} parent=11 // pred_check
        %p118 = pneg %p56
      $region14: #{actor_critic_forward.5} parent=11 // pred_check_branch
        %120 = sbr.rel (%p118) target = $region16
      $region15: #{actor_critic_forward.5} parent=11 // pred_region
        _
      $region16: #{actor_critic_forward.5} parent=11 // pred_fallthru
        _
      // Predicated region
      $region17: #{actor_critic_forward.5} parent=11 // pred_check
        %p121 = pneg %p77
      $region18: #{actor_critic_forward.5} parent=11 // pred_check_branch
        %123 = sbr.rel (%p121) target = $region20
      $region19: #{actor_critic_forward.5} parent=11 // pred_region
        _
      $region20: #{actor_critic_forward.5} parent=11 // pred_fallthru
        _
    $region12: #{actor_critic_forward.5} parent=5 // pred_fallthru
      _
    %p124 = scmp.lt.s32.totalorder %s9, 2
    // Predicated region
    $region21: #{actor_critic_forward.5} parent=5 // pred_check
      %p125 = pneg %p124
    $region22: #{actor_critic_forward.5} parent=5 // pred_check_branch
      %127 = sbr.rel (%p125) target = $region24
    $region23: #{actor_critic_forward.5} parent=5 // pred_region
      // Predicated region
      $region25: #{actor_critic_forward.5} parent=23 // pred_check
        %p128 = pneg %p29
      $region26: #{actor_critic_forward.5} parent=23 // pred_check_branch
        %130 = sbr.rel (%p128) target = $region28
      $region27: #{actor_critic_forward.5} parent=23 // pred_region
        %s131 = smul.u32 8, %s9
        %p132 = scmp.lt.s32.totalorder %s131, 15
        %s133 = scalar_select %p132, %s131, 15
        %s134 = smul.addr %s133, 2
        %s135 = smul.addr %s134, 8
        %s136 = scalar_lea.vmem %s0, %s135
        %s137 = smul.u32 8, %s9
      $region28: #{actor_critic_forward.5} parent=23 // pred_fallthru
        _
    $region24: #{actor_critic_forward.5} parent=5 // pred_fallthru
      _
    %p138 = scmp.le.s32.totalorder 1, %s9
    %p139 = scmp.lt.s32.totalorder %s9, 3
    %p140 = pnand %p138, %p139
    %p141 = pneg %p140
    // Predicated region
    $region29: #{actor_critic_forward.5} parent=5 // pred_check
      _
    $region30: #{actor_critic_forward.5} parent=5 // pred_check_branch
      %143 = sbr.rel (%p140) target = $region32
    $region31: #{actor_critic_forward.5} parent=5 // pred_region
      %s144 = ssub.s32 %s9, 1
      %s145 = smul.u32 8, %s14
      %p146 = scmp.lt.s32.totalorder %s145, 15
      %s147 = scalar_select %p146, %s145, 15
      %s148 = smul.addr %s147, 2
      %s149 = smul.addr %s148, 8
      %s150 = scalar_lea.vmem %s0, %s149
      %p151 = pneg %p35
      %p152 = pneg %p32
      %p153 = pneg %p56
      %p154 = pneg %p53
      %p155 = pneg %p77
      %p156 = pneg %p74
      %p157 = pneg %p103
      %p158 = pneg %p100
      %s159 = smul.u32 8, %s14
      %p160 = scmp.lt.s32.totalorder %s159, 15
      %s161 = scalar_select %p160, %s159, 15
      %s162 = smul.addr %s161, 8
      %s163 = scalar_lea.vmem %s3, %s162
      %s164 = smul.u32 8, %s14
      %p165 = scmp.lt.s32.totalorder %s164, 15
      %s166 = scalar_select %p165, %s164, 15
      %s167 = smul.addr %s166, 2
      %s168 = smul.addr %s167, 8
      %s169 = scalar_lea.vmem %s0, %s168
      %s170 = smul.u32 8, %s14
      %s171 = smul.u32 8, %s14
      %p172 = scmp.lt.s32.totalorder %s171, 15
      %s173 = scalar_select %p172, %s171, 15
      %s174 = smul.addr %s173, 8
      %s175 = scalar_lea.vmem %s3, %s174
      %s176 = smul.u32 8, %s14
      %v177 = vld [vmem:[%s1] sm:$0xff]
      %v178 = vld [vmem:[%s1 + $0x8] sm:$0xff]
      %v179 = vld [vmem:[%s1 + $0x10] sm:$0xff]
      %v180 = vld [vmem:[%s1 + $0x18] sm:$0xff]
      %v181 = vld [vmem:[%s1 + $0x20] sm:$0xff]
      %v182 = vld [vmem:[%s1 + $0x28] sm:$0xff]
      %v183 = vld [vmem:[%s1 + $0x30] sm:$0xff]
      %v184 = vld [vmem:[%s1 + $0x38] sm:$0xff]
      %v185 = vld [vmem:[%s1 + $0x40] sm:$0xff]
      %v186 = vld [vmem:[%s1 + $0x48] sm:$0xff]
      %v187 = vld [vmem:[%s1 + $0x50] sm:$0xff]
      %v188 = vld [vmem:[%s1 + $0x58] sm:$0xff]
      %v189 = vld [vmem:[%s1 + $0x60] sm:$0xff]
      %v190 = vld [vmem:[%s1 + $0x68] sm:$0xff]
      %v191 = vld [vmem:[%s1 + $0x70] sm:$0xff]
      %v192 = vld [vmem:[%s1 + $0x78] sm:$0xff]
      %v193 = vld [vmem:[%s1 + $0x80] sm:$0xff]
      %v194 = vld [vmem:[%s1 + $0x88] sm:$0xff]
      %v195 = vld [vmem:[%s1 + $0x90] sm:$0xff]
      %v196 = vld [vmem:[%s1 + $0x98] sm:$0xff]
      %v197 = vld [vmem:[%s1 + $0xa0] sm:$0xff]
      %v198 = vld [vmem:[%s1 + $0xa8] sm:$0xff]
      %v199 = vld [vmem:[%s1 + $0xb0] sm:$0xff]
      %v200 = vld [vmem:[%s1 + $0xb8] sm:$0xff]
      %v201 = vld [vmem:[%s1 + $0xc0] sm:$0xff]
      %v202 = vld [vmem:[%s1 + $0xc8] sm:$0xff]
      %v203 = vld [vmem:[%s1 + $0xd0] sm:$0xff]
      %v204 = vld [vmem:[%s1 + $0xd8] sm:$0xff]
      %v205 = vld [vmem:[%s1 + $0xe0] sm:$0xff]
      %v206 = vld [vmem:[%s1 + $0xe8] sm:$0xff]
      %v207 = vld [vmem:[%s1 + $0xf0] sm:$0xff]
      %v208 = vld [vmem:[%s1 + $0xf8] sm:$0xff]
      %v209 = vld [vmem:[%s169] sm:$0xff]
      %v210 = vld [vmem:[%s169 + $0x8] sm:$0xff]
      %v211 = vld [vmem:[%s169 + $0x10] sm:$0xff]
      %v212 = vld [vmem:[%s169 + $0x18] sm:$0xff]
      %v213 = vld [vmem:[%s169 + $0x20] sm:$0xff]
      %v214 = vld [vmem:[%s169 + $0x28] sm:$0xff]
      %v215 = vld [vmem:[%s169 + $0x30] sm:$0xff]
      %v216 = vld [vmem:[%s169 + $0x38] sm:$0xff]
      %v217 = vld [vmem:[%s169 + $0x40] sm:$0xff]
      %v218 = vld [vmem:[%s169 + $0x48] sm:$0xff]
      %v219 = vld [vmem:[%s169 + $0x50] sm:$0xff]
      %v220 = vld [vmem:[%s169 + $0x58] sm:$0xff]
      %v221 = vld [vmem:[%s169 + $0x60] sm:$0xff]
      %v222 = vld [vmem:[%s169 + $0x68] sm:$0xff]
      %v223 = vld [vmem:[%s169 + $0x70] sm:$0xff]
      %v224 = vld [vmem:[%s169 + $0x78] sm:$0xff]
      %v225 = vld [vmem:[%s2] sm:$0x1]
      %v227 = vlaneseq
      %v228 = vshrl.u32 %v227, 7
      %v229 = vsub.s32 0, %v228
      %v230 = vrot.slane %v225, %v229
      %232 = vmatprep.subr.mxu0 0.0
      %233 = vmatpush1.msra.mxu0 %v192
      %234 = vmatprep.subr.mxu0 0.0
      %235 = vmatpush1.msra.mxu0 %v191
      %236 = vmatprep.subr.mxu0 0.0
      %237 = vmatpush1.msra.mxu0 %v190
      %238 = vmatprep.subr.mxu0 0.0
      %239 = vmatpush1.msra.mxu0 %v189
      %240 = vmatprep.subr.mxu0 0.0
      %241 = vmatpush1.msra.mxu0 %v188
      %242 = vmatprep.subr.mxu0 0.0
      %243 = vmatpush1.msra.mxu0 %v187
      %244 = vmatprep.subr.mxu0 0.0
      %245 = vmatpush1.msra.mxu0 %v186
      %246 = vmatprep.subr.mxu0 0.0
      %247 = vmatpush1.msra.mxu0 %v185
      %248 = vmatprep.subr.mxu0 0.0
      %249 = vmatpush1.msra.mxu0 %v184
      %250 = vmatprep.subr.mxu0 0.0
      %251 = vmatpush1.msra.mxu0 %v183
      %252 = vmatprep.subr.mxu0 0.0
      %253 = vmatpush1.msra.mxu0 %v182
      %254 = vmatprep.subr.mxu0 0.0
      %255 = vmatpush1.msra.mxu0 %v181
      %256 = vmatprep.subr.mxu0 0.0
      %257 = vmatpush1.msra.mxu0 %v180
      %258 = vmatprep.subr.mxu0 0.0
      %259 = vmatpush1.msra.mxu0 %v179
      %260 = vmatprep.subr.mxu0 0.0
      %261 = vmatpush1.msra.mxu0 %v178
      %262 = vmatprep.subr.mxu0 0.0
      %263 = vmatpush1.msra.mxu0 %v177
      %264 = vmatprep.subr.mxu0 0.0
      %265 = vmatpush2.msra.mxu0 %v208
      %266 = vmatprep.subr.mxu0 0.0
      %267 = vmatpush2.msra.mxu0 %v207
      %268 = vmatprep.subr.mxu0 0.0
      %269 = vmatpush2.msra.mxu0 %v206
      %270 = vmatprep.subr.mxu0 0.0
      %271 = vmatpush2.msra.mxu0 %v205
      %272 = vmatprep.subr.mxu0 0.0
      %273 = vmatpush2.msra.mxu0 %v204
      %274 = vmatprep.subr.mxu0 0.0
      %275 = vmatpush2.msra.mxu0 %v203
      %276 = vmatprep.subr.mxu0 0.0
      %277 = vmatpush2.msra.mxu0 %v202
      %278 = vmatprep.subr.mxu0 0.0
      %279 = vmatpush2.msra.mxu0 %v201
      %280 = vmatprep.subr.mxu0 0.0
      %281 = vmatpush2.msra.mxu0 %v200
      %282 = vmatprep.subr.mxu0 0.0
      %283 = vmatpush2.msra.mxu0 %v199
      %284 = vmatprep.subr.mxu0 0.0
      %285 = vmatpush2.msra.mxu0 %v198
      %286 = vmatprep.subr.mxu0 0.0
      %287 = vmatpush2.msra.mxu0 %v197
      %288 = vmatprep.subr.mxu0 0.0
      %289 = vmatpush2.msra.mxu0 %v196
      %290 = vmatprep.subr.mxu0 0.0
      %291 = vmatpush2.msra.mxu0 %v195
      %292 = vmatprep.subr.mxu0 0.0
      %293 = vmatpush2.msra.mxu0 %v194
      %294 = vmatprep.subr.mxu0 0.0
      %295 = vmatpush2.msra.mxu0 %v193
      %296 = vmatprep.mubr.f32.mxu0 %v210
      %297 = vmatmul.mubr.f32.gmra.mxu0 %v209
      %v298 = vpop.f32.mrf.mxu0
      %v299 = vadd.f32 %v230, %v298
      %v300 = vpop.f32.mrf.mxu0
      %301 = vmatprep.mubr.f32.mxu0 %v212
      %302 = vmatmul.mubr.f32.gmra.mxu0 %v211
      %v303 = vpop.f32.mrf.mxu0
      %v304 = vadd.f32 %v230, %v303
      %v305 = vpop.f32.mrf.mxu0
      %306 = vmatprep.mubr.f32.mxu0 %v214
      %307 = vmatmul.mubr.f32.gmra.mxu0 %v213
      %v308 = vpop.f32.mrf.mxu0
      %v309 = vadd.f32 %v230, %v308
      %v310 = vpop.f32.mrf.mxu0
      %311 = vmatprep.mubr.f32.mxu0 %v216
      %312 = vmatmul.mubr.f32.gmra.mxu0 %v215
      %v313 = vpop.f32.mrf.mxu0
      %v314 = vadd.f32 %v230, %v313
      %v315 = vpop.f32.mrf.mxu0
      %316 = vmatprep.mubr.f32.mxu0 %v218
      %317 = vmatmul.mubr.f32.gmra.mxu0 %v217
      %v318 = vpop.f32.mrf.mxu0
      %v319 = vadd.f32 %v230, %v318
      %v320 = vpop.f32.mrf.mxu0
      %321 = vmatprep.mubr.f32.mxu0 %v220
      %322 = vmatmul.mubr.f32.gmra.mxu0 %v219
      %v323 = vpop.f32.mrf.mxu0
      %v324 = vadd.f32 %v230, %v323
      %v325 = vpop.f32.mrf.mxu0
      %326 = vmatprep.mubr.f32.mxu0 %v222
      %327 = vmatmul.mubr.f32.gmra.mxu0 %v221
      %v328 = vpop.f32.mrf.mxu0
      %v329 = vadd.f32 %v230, %v328
      %v330 = vpop.f32.mrf.mxu0
      %331 = vmatprep.mubr.f32.mxu0 %v224
      %332 = vmatmul.mubr.f32.gmra.mxu0 %v223
      %v333 = vpop.f32.mrf.mxu0
      %v334 = vadd.f32 %v230, %v333
      %v335 = vpop.f32.mrf.mxu0
      %336 = vdwg.mxu0
      %v337 = vmax.f32 %v299, 0.0
      %v338 = vmax.f32 %v304, 0.0
      %v339 = vmax.f32 %v309, 0.0
      %v340 = vmax.f32 %v314, 0.0
      %v341 = vmax.f32 %v319, 0.0
      %v342 = vmax.f32 %v324, 0.0
      %v343 = vmax.f32 %v329, 0.0
      %v344 = vmax.f32 %v334, 0.0
      %vm345 = vcmask 261120
      %346 = vst.msk [vmem:[%s175] sm:$0xff] %vm345, %v337
      %347 = vst.msk [vmem:[%s175 + $0x8] sm:$0xff] %vm345, %v338
      %348 = vst.msk [vmem:[%s175 + $0x10] sm:$0xff] %vm345, %v339
      %349 = vst.msk [vmem:[%s175 + $0x18] sm:$0xff] %vm345, %v340
      %350 = vst.msk [vmem:[%s175 + $0x20] sm:$0xff] %vm345, %v341
      %351 = vst.msk [vmem:[%s175 + $0x28] sm:$0xff] %vm345, %v342
      %352 = vst.msk [vmem:[%s175 + $0x30] sm:$0xff] %vm345, %v343
      %353 = vst.msk [vmem:[%s175 + $0x38] sm:$0xff] %vm345, %v344
      %s354 = smul.u32 8, %s14
      %p355 = scmp.lt.s32.totalorder %s354, 15
      %s356 = scalar_select %p355, %s354, 15
      %s357 = smul.addr %s356, 8
      %s358 = scalar_lea.vmem %s3, %s357
      // Predicated region
      $region33: #{actor_critic_forward.5} parent=31 // pred_check
        %p359 = pneg %p100
      $region34: #{actor_critic_forward.5} parent=31 // pred_check_branch
        %361 = sbr.rel (%p359) target = $region36
      $region35: #{actor_critic_forward.5} parent=31 // pred_region
        %s362 = smul.u32 8, %s14
      $region36: #{actor_critic_forward.5} parent=31 // pred_fallthru
        _
    $region32: #{actor_critic_forward.5} parent=5 // pred_fallthru
      _
    %p363 = scmp.le.s32.totalorder 2, %s9
    // Predicated region
    $region37: #{actor_critic_forward.5} parent=5 // pred_check
      %p364 = pneg %p363
    $region38: #{actor_critic_forward.5} parent=5 // pred_check_branch
      %366 = sbr.rel (%p364) target = $region40
    $region39: #{actor_critic_forward.5} parent=5 // pred_region
      %s367 = ssub.s32 %s9, 2
      // Predicated region
      $region41: #{actor_critic_forward.5} parent=39 // pred_check
        %p368 = pneg %p106
      $region42: #{actor_critic_forward.5} parent=39 // pred_check_branch
        %370 = sbr.rel (%p368) target = $region44
      $region43: #{actor_critic_forward.5} parent=39 // pred_region
        %s371 = smul.u32 8, %s15
        %p372 = scmp.lt.s32.totalorder %s371, 15
        %s373 = scalar_select %p372, %s371, 15
        %s374 = smul.addr %s373, 8
        %s375 = scalar_lea.vmem %s3, %s374
      $region44: #{actor_critic_forward.5} parent=39 // pred_fallthru
        _
    $region40: #{actor_critic_forward.5} parent=5 // pred_fallthru
      _
  $region6: #{actor_critic_forward.5} parent=0 // loop_footer
    %s13 = sadd.s32 1, %s9
  $region7: #{actor_critic_forward.5} parent=0 // loop_footer_branch
    %8 = sbr.rel target = $region3
  $region8: #{actor_critic_forward.5} parent=0 // loop_exit
    _

// kernel: actor_critic_forward.7
$region0: #{actor_critic_forward.7}
  #allocation0 [shape = 'u32[]', space=smem, size = 0x4, offset = 0x4, fixed_abs, tag = 'smem constant byte address 0x4 - core index']
  #allocation1 [shape = 'u32[144,128]{1,0:T(1,128)}', space=vmem, size = 0x12000, scoped, tag = 'internal scratch']
  %s0 = inlined_call_operand.vmem [shape: f32[2,64], index: 0, kind: input, shape index: {}]
  %s1 = inlined_call_operand.vmem [shape: f32[64,256], index: 1, kind: input, shape index: {}]
  %s2 = inlined_call_operand.vmem [shape: f32[1,256], index: 2, kind: input, shape index: {}]
  %s3 = inlined_call_operand.vmem [shape: f32[256,128], index: 3, kind: input, shape index: {}]
  %s4 = inlined_call_operand.vmem [shape: f32[1,128], index: 4, kind: input, shape index: {}]
  %s5 = inlined_call_operand.vmem [shape: f32[2,128], index: 5, kind: output, shape index: {}]
  %s6 = sld [smem:[#allocation0]]
  $region30: #{actor_critic_forward.7} parent=0
    _
  %s8 = ssub.s32 1, %s6
  %s9 = scalar_select 0, %s8, %s6
  // Predicated region
  $region2: #{actor_critic_forward.7} parent=0 // pred_check
    _
  $region3: #{actor_critic_forward.7} parent=0 // pred_check_branch
    %11 = sbr.rel (0) target = $region5
  $region4: #{actor_critic_forward.7} parent=0 // pred_region
    _
  $region5: #{actor_critic_forward.7} parent=0 // pred_fallthru
    _
  // Predicated region
  $region6: #{actor_critic_forward.7} parent=0 // pred_check
    _
  $region7: #{actor_critic_forward.7} parent=0 // pred_check_branch
    %13 = sbr.rel (0) target = $region9
  $region8: #{actor_critic_forward.7} parent=0 // pred_region
    _
  $region9: #{actor_critic_forward.7} parent=0 // pred_fallthru
    _
  // Predicated region
  $region10: #{actor_critic_forward.7} parent=0 // pred_check
    _
  $region11: #{actor_critic_forward.7} parent=0 // pred_check_branch
    %15 = sbr.rel (0) target = $region13
  $region12: #{actor_critic_forward.7} parent=0 // pred_region
    _
  $region13: #{actor_critic_forward.7} parent=0 // pred_fallthru
    _
  // Predicated region
  $region14: #{actor_critic_forward.7} parent=0 // pred_check
    _
  $region15: #{actor_critic_forward.7} parent=0 // pred_check_branch
    %17 = sbr.rel (0) target = $region17
  $region16: #{actor_critic_forward.7} parent=0 // pred_region
    _
  $region17: #{actor_critic_forward.7} parent=0 // pred_fallthru
    _
  // Predicated region
  $region18: #{actor_critic_forward.7} parent=0 // pred_check
    _
  $region19: #{actor_critic_forward.7} parent=0 // pred_check_branch
    %19 = sbr.rel (0) target = $region21
  $region20: #{actor_critic_forward.7} parent=0 // pred_region
    _
  $region21: #{actor_critic_forward.7} parent=0 // pred_fallthru
    _
  %v20 = vld [vmem:[%s1] sm:$0xff]
  %v21 = vld [vmem:[%s1 + $0x8] sm:$0xff]
  %v22 = vld [vmem:[%s1 + $0x10] sm:$0xff]
  %v23 = vld [vmem:[%s1 + $0x18] sm:$0xff]
  %v24 = vld [vmem:[%s1 + $0x20] sm:$0xff]
  %v25 = vld [vmem:[%s1 + $0x28] sm:$0xff]
  %v26 = vld [vmem:[%s1 + $0x30] sm:$0xff]
  %v27 = vld [vmem:[%s1 + $0x38] sm:$0xff]
  %v28 = vld [vmem:[%s1 + $0x40] sm:$0xff]
  %v29 = vld [vmem:[%s1 + $0x48] sm:$0xff]
  %v30 = vld [vmem:[%s1 + $0x50] sm:$0xff]
  %v31 = vld [vmem:[%s1 + $0x58] sm:$0xff]
  %v32 = vld [vmem:[%s1 + $0x60] sm:$0xff]
  %v33 = vld [vmem:[%s1 + $0x68] sm:$0xff]
  %v34 = vld [vmem:[%s1 + $0x70] sm:$0xff]
  %v35 = vld [vmem:[%s1 + $0x78] sm:$0xff]
  %v36 = vld [vmem:[%s0] sm:$0x3]
  %v37 = vld [vmem:[%s2] sm:$0x3]
  %v39 = vlaneseq
  %v40 = vshrl.u32 %v39, 7
  %v41 = vsub.s32 0, %v40
  %v42 = vrot.slane %v37, %v41
  %v43 = vlaneseq
  %v44 = vshrl.u32 %v43, 7
  %v45 = vsub.s32 1, %v44
  %v46 = vrot.slane %v37, %v45
  %vm49 = vcmask 523264
  %v51 = vsel %vm49, %v36, 0
  %53 = vmatprep.subr.mxu0 0.0
  %54 = vmatpush1.msra.mxu0 0.0
  %55 = vmatprep.subr.mxu0 0.0
  %56 = vmatpush1.msra.mxu0 0.0
  %57 = vmatprep.subr.mxu0 0.0
  %58 = vmatpush1.msra.mxu0 0.0
  %59 = vmatprep.subr.mxu0 0.0
  %60 = vmatpush1.msra.mxu0 0.0
  %61 = vmatprep.subr.mxu0 0.0
  %62 = vmatpush1.msra.mxu0 0.0
  %63 = vmatprep.subr.mxu0 0.0
  %64 = vmatpush1.msra.mxu0 0.0
  %65 = vmatprep.subr.mxu0 0.0
  %66 = vmatpush1.msra.mxu0 0.0
  %67 = vmatprep.subr.mxu0 0.0
  %68 = vmatpush1.msra.mxu0 0.0
  %69 = vmatprep.subr.mxu0 %v35
  %70 = vmatpush1.msra.mxu0 %v34
  %71 = vmatprep.subr.mxu0 %v33
  %72 = vmatpush1.msra.mxu0 %v32
  %73 = vmatprep.subr.mxu0 %v31
  %74 = vmatpush1.msra.mxu0 %v30
  %75 = vmatprep.subr.mxu0 %v29
  %76 = vmatpush1.msra.mxu0 %v28
  %77 = vmatprep.subr.mxu0 %v27
  %78 = vmatpush1.msra.mxu0 %v26
  %79 = vmatprep.subr.mxu0 %v25
  %80 = vmatpush1.msra.mxu0 %v24
  %81 = vmatprep.subr.mxu0 %v23
  %82 = vmatpush1.msra.mxu0 %v22
  %83 = vmatprep.subr.mxu0 %v21
  %84 = vmatpush1.msra.mxu0 %v20
  %85 = vmatprep.subr.mxu0 0.0
  %86 = vmatpush2.msra.mxu0 0.0
  %87 = vmatprep.subr.mxu0 0.0
  %88 = vmatpush2.msra.mxu0 0.0
  %89 = vmatprep.subr.mxu0 0.0
  %90 = vmatpush2.msra.mxu0 0.0
  %91 = vmatprep.subr.mxu0 0.0
  %92 = vmatpush2.msra.mxu0 0.0
  %93 = vmatprep.subr.mxu0 0.0
  %94 = vmatpush2.msra.mxu0 0.0
  %95 = vmatprep.subr.mxu0 0.0
  %96 = vmatpush2.msra.mxu0 0.0
  %97 = vmatprep.subr.mxu0 0.0
  %98 = vmatpush2.msra.mxu0 0.0
  %99 = vmatprep.subr.mxu0 0.0
  %100 = vmatpush2.msra.mxu0 0.0
  %101 = vmatprep.subr.mxu0 0.0
  %102 = vmatpush2.msra.mxu0 0.0
  %103 = vmatprep.subr.mxu0 0.0
  %104 = vmatpush2.msra.mxu0 0.0
  %105 = vmatprep.subr.mxu0 0.0
  %106 = vmatpush2.msra.mxu0 0.0
  %107 = vmatprep.subr.mxu0 0.0
  %108 = vmatpush2.msra.mxu0 0.0
  %109 = vmatprep.subr.mxu0 0.0
  %110 = vmatpush2.msra.mxu0 0.0
  %111 = vmatprep.subr.mxu0 0.0
  %112 = vmatpush2.msra.mxu0 0.0
  %113 = vmatprep.subr.mxu0 0.0
  %114 = vmatpush2.msra.mxu0 0.0
  %115 = vmatprep.subr.mxu0 0.0
  %116 = vmatpush2.msra.mxu0 0.0
  %117 = vmatprep.mubr.f32.mxu0 0.0
  %118 = vmatmul.mubr.f32.gmra.mxu0 %v51
  %v119 = vpop.f32.mrf.mxu0
  %v120 = vadd.f32 %v42, %v119
  %v121 = vpop.f32.mrf.mxu0
  %v122 = vadd.f32 %v46, %v121
  %123 = vdwg.mxu0
  %v124 = vmax.f32 %v120, 0.0
  %v125 = vmax.f32 %v122, 0.0
  %v126 = vld [vmem:[%s3] sm:$0xff]
  %v127 = vld [vmem:[%s3 + $0x8] sm:$0xff]
  %v128 = vld [vmem:[%s3 + $0x10] sm:$0xff]
  %v129 = vld [vmem:[%s3 + $0x18] sm:$0xff]
  %v130 = vld [vmem:[%s3 + $0x20] sm:$0xff]
  %v131 = vld [vmem:[%s3 + $0x28] sm:$0xff]
  %v132 = vld [vmem:[%s3 + $0x30] sm:$0xff]
  %v133 = vld [vmem:[%s3 + $0x38] sm:$0xff]
  %v134 = vld [vmem:[%s3 + $0x40] sm:$0xff]
  %v135 = vld [vmem:[%s3 + $0x48] sm:$0xff]
  %v136 = vld [vmem:[%s3 + $0x50] sm:$0xff]
  %v137 = vld [vmem:[%s3 + $0x58] sm:$0xff]
  %v138 = vld [vmem:[%s3 + $0x60] sm:$0xff]
  %v139 = vld [vmem:[%s3 + $0x68] sm:$0xff]
  %v140 = vld [vmem:[%s3 + $0x70] sm:$0xff]
  %v141 = vld [vmem:[%s3 + $0x78] sm:$0xff]
  %v142 = vld [vmem:[%s3 + $0x80] sm:$0xff]
  %v143 = vld [vmem:[%s3 + $0x88] sm:$0xff]
  %v144 = vld [vmem:[%s3 + $0x90] sm:$0xff]
  %v145 = vld [vmem:[%s3 + $0x98] sm:$0xff]
  %v146 = vld [vmem:[%s3 + $0xa0] sm:$0xff]
  %v147 = vld [vmem:[%s3 + $0xa8] sm:$0xff]
  %v148 = vld [vmem:[%s3 + $0xb0] sm:$0xff]
  %v149 = vld [vmem:[%s3 + $0xb8] sm:$0xff]
  %v150 = vld [vmem:[%s3 + $0xc0] sm:$0xff]
  %v151 = vld [vmem:[%s3 + $0xc8] sm:$0xff]
  %v152 = vld [vmem:[%s3 + $0xd0] sm:$0xff]
  %v153 = vld [vmem:[%s3 + $0xd8] sm:$0xff]
  %v154 = vld [vmem:[%s3 + $0xe0] sm:$0xff]
  %v155 = vld [vmem:[%s3 + $0xe8] sm:$0xff]
  %v156 = vld [vmem:[%s3 + $0xf0] sm:$0xff]
  %v157 = vld [vmem:[%s3 + $0xf8] sm:$0xff]
  %v158 = vld [vmem:[%s4] sm:$0x1]
  %v160 = vlaneseq
  %v161 = vshrl.u32 %v160, 7
  %v162 = vsub.s32 0, %v161
  %v163 = vrot.slane %v158, %v162
  %165 = vmatprep.subr.mxu0 0.0
  %166 = vmatpush1.msra.mxu0 %v141
  %167 = vmatprep.subr.mxu0 0.0
  %168 = vmatpush1.msra.mxu0 %v140
  %169 = vmatprep.subr.mxu0 0.0
  %170 = vmatpush1.msra.mxu0 %v139
  %171 = vmatprep.subr.mxu0 0.0
  %172 = vmatpush1.msra.mxu0 %v138
  %173 = vmatprep.subr.mxu0 0.0
  %174 = vmatpush1.msra.mxu0 %v137
  %175 = vmatprep.subr.mxu0 0.0
  %176 = vmatpush1.msra.mxu0 %v136
  %177 = vmatprep.subr.mxu0 0.0
  %178 = vmatpush1.msra.mxu0 %v135
  %179 = vmatprep.subr.mxu0 0.0
  %180 = vmatpush1.msra.mxu0 %v134
  %181 = vmatprep.subr.mxu0 0.0
  %182 = vmatpush1.msra.mxu0 %v133
  %183 = vmatprep.subr.mxu0 0.0
  %184 = vmatpush1.msra.mxu0 %v132
  %185 = vmatprep.subr.mxu0 0.0
  %186 = vmatpush1.msra.mxu0 %v131
  %187 = vmatprep.subr.mxu0 0.0
  %188 = vmatpush1.msra.mxu0 %v130
  %189 = vmatprep.subr.mxu0 0.0
  %190 = vmatpush1.msra.mxu0 %v129
  %191 = vmatprep.subr.mxu0 0.0
  %192 = vmatpush1.msra.mxu0 %v128
  %193 = vmatprep.subr.mxu0 0.0
  %194 = vmatpush1.msra.mxu0 %v127
  %195 = vmatprep.subr.mxu0 0.0
  %196 = vmatpush1.msra.mxu0 %v126
  %197 = vmatprep.subr.mxu0 0.0
  %198 = vmatpush2.msra.mxu0 %v157
  %199 = vmatprep.subr.mxu0 0.0
  %200 = vmatpush2.msra.mxu0 %v156
  %201 = vmatprep.subr.mxu0 0.0
  %202 = vmatpush2.msra.mxu0 %v155
  %203 = vmatprep.subr.mxu0 0.0
  %204 = vmatpush2.msra.mxu0 %v154
  %205 = vmatprep.subr.mxu0 0.0
  %206 = vmatpush2.msra.mxu0 %v153
  %207 = vmatprep.subr.mxu0 0.0
  %208 = vmatpush2.msra.mxu0 %v152
  %209 = vmatprep.subr.mxu0 0.0
  %210 = vmatpush2.msra.mxu0 %v151
  %211 = vmatprep.subr.mxu0 0.0
  %212 = vmatpush2.msra.mxu0 %v150
  %213 = vmatprep.subr.mxu0 0.0
  %214 = vmatpush2.msra.mxu0 %v149
  %215 = vmatprep.subr.mxu0 0.0
  %216 = vmatpush2.msra.mxu0 %v148
  %217 = vmatprep.subr.mxu0 0.0
  %218 = vmatpush2.msra.mxu0 %v147
  %219 = vmatprep.subr.mxu0 0.0
  %220 = vmatpush2.msra.mxu0 %v146
  %221 = vmatprep.subr.mxu0 0.0
  %222 = vmatpush2.msra.mxu0 %v145
  %223 = vmatprep.subr.mxu0 0.0
  %224 = vmatpush2.msra.mxu0 %v144
  %225 = vmatprep.subr.mxu0 0.0
  %226 = vmatpush2.msra.mxu0 %v143
  %227 = vmatprep.subr.mxu0 0.0
  %228 = vmatpush2.msra.mxu0 %v142
  %229 = vmatprep.mubr.f32.mxu0 %v125
  %230 = vmatmul.mubr.f32.gmra.mxu0 %v124
  %v231 = vpop.f32.mrf.mxu0
  %v232 = vadd.f32 %v163, %v231
  %v233 = vpop.f32.mrf.mxu0
  %234 = vdwg.mxu0
  %235 = vst [vmem:[%s5] sm:$0x3] %v232
  // Predicated region
  $region22: #{actor_critic_forward.7} parent=0 // pred_check
    _
  $region23: #{actor_critic_forward.7} parent=0 // pred_check_branch
    %237 = sbr.rel (0) target = $region25
  $region24: #{actor_critic_forward.7} parent=0 // pred_region
    _
  $region25: #{actor_critic_forward.7} parent=0 // pred_fallthru
    _
  // Predicated region
  $region26: #{actor_critic_forward.7} parent=0 // pred_check
    _
  $region27: #{actor_critic_forward.7} parent=0 // pred_check_branch
    %239 = sbr.rel (0) target = $region29
  $region28: #{actor_critic_forward.7} parent=0 // pred_region
    _
  $region29: #{actor_critic_forward.7} parent=0 // pred_fallthru
    _

// kernel: actor_critic_forward.8
$region0: #{actor_critic_forward.8}
  #allocation0 [shape = 'u32[]', space=smem, size = 0x4, offset = 0x4, fixed_abs, tag = 'smem constant byte address 0x4 - core index']
  #allocation1 [shape = 'u32[144,128]{1,0:T(1,128)}', space=vmem, size = 0x12000, scoped, tag = 'internal scratch']
  %s0 = inlined_call_operand.vmem [shape: f32[576,64], index: 0, kind: input, shape index: {}]
  %s1 = inlined_call_operand.vmem [shape: f32[1,64], index: 1, kind: input, shape index: {}]
  %s2 = inlined_call_operand.vmem [shape: f32[2,1,1,576], index: 2, kind: input, shape index: {}]
  %s3 = inlined_call_operand.vmem [shape: f32[2,64], index: 3, kind: output, shape index: {}]
  %s4 = sld [smem:[#allocation0]]
  $region22: #{actor_critic_forward.8} parent=0
    _
  %s6 = ssub.s32 1, %s4
  %s7 = scalar_select 0, %s6, %s4
  $region1: #{actor_critic_forward.8} parent=0
    #allocation2 [shape = 'u8[5120]{0}', space=vmem, size = 0x1400, dematerialized = true, scoped, tag = 'FusionAdapter Buffer %fusion.1 = f32[2,576]{1,0:T(2,128)} fusion(%param_2.1), kind=kLoop, calls=%fused_computation.1.clone, metadata={op_name="jit(actor_critic_forward)/reshape" stack_frame_id=27}']
    // Predicated region
    $region2: #{actor_critic_forward.8} parent=1 // pred_check
      _
    $region3: #{actor_critic_forward.8} parent=1 // pred_check_branch
      %9 = sbr.rel (0) target = $region5
    $region4: #{actor_critic_forward.8} parent=1 // pred_region
      _
    $region5: #{actor_critic_forward.8} parent=1 // pred_fallthru
      _
    // Predicated region
    $region6: #{actor_critic_forward.8} parent=1 // pred_check
      _
    $region7: #{actor_critic_forward.8} parent=1 // pred_check_branch
      %11 = sbr.rel (0) target = $region9
    $region8: #{actor_critic_forward.8} parent=1 // pred_region
      _
    $region9: #{actor_critic_forward.8} parent=1 // pred_fallthru
      _
    // Predicated region
    $region10: #{actor_critic_forward.8} parent=1 // pred_check
      _
    $region11: #{actor_critic_forward.8} parent=1 // pred_check_branch
      %13 = sbr.rel (0) target = $region13
    $region12: #{actor_critic_forward.8} parent=1 // pred_region
      _
    $region13: #{actor_critic_forward.8} parent=1 // pred_fallthru
      _
    %v14 = vld [vmem:[%s2] sm:$0x3]
    %s16 = ssub.s32 4, 1
    %17 = vst [vmem:[#allocation2] sm:%s16] %v14
    %s18 = scalar_lea.vmem %s2, 2
    %v19 = vld [vmem:[%s18] sm:$0x3]
    %s20 = scalar_lea.vmem [#allocation2], 2
    %s22 = ssub.s32 4, 1
    %23 = vst [vmem:[%s20] sm:%s22] %v19
    %s24 = scalar_lea.vmem %s2, 4
    %v25 = vld [vmem:[%s24] sm:$0x3]
    %s26 = scalar_lea.vmem [#allocation2], 4
    %s28 = ssub.s32 4, 1
    %29 = vst [vmem:[%s26] sm:%s28] %v25
    %s30 = scalar_lea.vmem %s2, 6
    %v31 = vld [vmem:[%s30] sm:$0x3]
    %s32 = scalar_lea.vmem [#allocation2], 6
    %s34 = ssub.s32 4, 1
    %35 = vst [vmem:[%s32] sm:%s34] %v31
    %s36 = scalar_lea.vmem %s2, 8
    %v37 = vld [vmem:[%s36] sm:$0x3]
    %s38 = scalar_lea.vmem [#allocation2], 8
    %s40 = ssub.s32 4, 1
    %41 = vst [vmem:[%s38] sm:%s40] %v37
    %v42 = vld [vmem:[%s0] sm:$0xff]
    %v43 = vld [vmem:[%s0 + $0x8] sm:$0xff]
    %v44 = vld [vmem:[%s0 + $0x10] sm:$0xff]
    %v45 = vld [vmem:[%s0 + $0x18] sm:$0xff]
    %v46 = vld [vmem:[%s0 + $0x20] sm:$0xff]
    %v47 = vld [vmem:[%s0 + $0x28] sm:$0xff]
    %v48 = vld [vmem:[%s0 + $0x30] sm:$0xff]
    %v49 = vld [vmem:[%s0 + $0x38] sm:$0xff]
    %v50 = vld [vmem:[%s0 + $0x40] sm:$0xff]
    %v51 = vld [vmem:[%s0 + $0x48] sm:$0xff]
    %v52 = vld [vmem:[%s0 + $0x50] sm:$0xff]
    %v53 = vld [vmem:[%s0 + $0x58] sm:$0xff]
    %v54 = vld [vmem:[%s0 + $0x60] sm:$0xff]
    %v55 = vld [vmem:[%s0 + $0x68] sm:$0xff]
    %v56 = vld [vmem:[%s0 + $0x70] sm:$0xff]
    %v57 = vld [vmem:[%s0 + $0x78] sm:$0xff]
    %v58 = vld [vmem:[%s0 + $0x80] sm:$0xff]
    %v59 = vld [vmem:[%s0 + $0x88] sm:$0xff]
    %v60 = vld [vmem:[%s0 + $0x90] sm:$0xff]
    %v61 = vld [vmem:[%s0 + $0x98] sm:$0xff]
    %v62 = vld [vmem:[%s0 + $0xa0] sm:$0xff]
    %v63 = vld [vmem:[%s0 + $0xa8] sm:$0xff]
    %v64 = vld [vmem:[%s0 + $0xb0] sm:$0xff]
    %v65 = vld [vmem:[%s0 + $0xb8] sm:$0xff]
    %v66 = vld [vmem:[%s0 + $0xc0] sm:$0xff]
    %v67 = vld [vmem:[%s0 + $0xc8] sm:$0xff]
    %v68 = vld [vmem:[%s0 + $0xd0] sm:$0xff]
    %v69 = vld [vmem:[%s0 + $0xd8] sm:$0xff]
    %v70 = vld [vmem:[%s0 + $0xe0] sm:$0xff]
    %v71 = vld [vmem:[%s0 + $0xe8] sm:$0xff]
    %v72 = vld [vmem:[%s0 + $0xf0] sm:$0xff]
    %v73 = vld [vmem:[%s0 + $0xf8] sm:$0xff]
    %v74 = vld [vmem:[%s0 + $0x100] sm:$0xff]
    %v75 = vld [vmem:[%s0 + $0x108] sm:$0xff]
    %v76 = vld [vmem:[%s0 + $0x110] sm:$0xff]
    %v77 = vld [vmem:[%s0 + $0x118] sm:$0xff]
    %v78 = vld [vmem:[%s0 + $0x120] sm:$0xff]
    %v79 = vld [vmem:[%s0 + $0x128] sm:$0xff]
    %v80 = vld [vmem:[%s0 + $0x130] sm:$0xff]
    %v81 = vld [vmem:[%s0 + $0x138] sm:$0xff]
    %v82 = vld [vmem:[%s0 + $0x140] sm:$0xff]
    %v83 = vld [vmem:[%s0 + $0x148] sm:$0xff]
    %v84 = vld [vmem:[%s0 + $0x150] sm:$0xff]
    %v85 = vld [vmem:[%s0 + $0x158] sm:$0xff]
    %v86 = vld [vmem:[%s0 + $0x160] sm:$0xff]
    %v87 = vld [vmem:[%s0 + $0x168] sm:$0xff]
    %v88 = vld [vmem:[%s0 + $0x170] sm:$0xff]
    %v89 = vld [vmem:[%s0 + $0x178] sm:$0xff]
    %v90 = vld [vmem:[%s0 + $0x180] sm:$0xff]
    %v91 = vld [vmem:[%s0 + $0x188] sm:$0xff]
    %v92 = vld [vmem:[%s0 + $0x190] sm:$0xff]
    %v93 = vld [vmem:[%s0 + $0x198] sm:$0xff]
    %v94 = vld [vmem:[%s0 + $0x1a0] sm:$0xff]
    %v95 = vld [vmem:[%s0 + $0x1a8] sm:$0xff]
    %v96 = vld [vmem:[%s0 + $0x1b0] sm:$0xff]
    %v97 = vld [vmem:[%s0 + $0x1b8] sm:$0xff]
    %v98 = vld [vmem:[%s0 + $0x1c0] sm:$0xff]
    %v99 = vld [vmem:[%s0 + $0x1c8] sm:$0xff]
    %v100 = vld [vmem:[%s0 + $0x1d0] sm:$0xff]
    %v101 = vld [vmem:[%s0 + $0x1d8] sm:$0xff]
    %v102 = vld [vmem:[%s0 + $0x1e0] sm:$0xff]
    %v103 = vld [vmem:[%s0 + $0x1e8] sm:$0xff]
    %v104 = vld [vmem:[%s0 + $0x1f0] sm:$0xff]
    %v105 = vld [vmem:[%s0 + $0x1f8] sm:$0xff]
    %v106 = vld [vmem:[%s0 + $0x200] sm:$0xff]
    %v107 = vld [vmem:[%s0 + $0x208] sm:$0xff]
    %v108 = vld [vmem:[%s0 + $0x210] sm:$0xff]
    %v109 = vld [vmem:[%s0 + $0x218] sm:$0xff]
    %v110 = vld [vmem:[%s0 + $0x220] sm:$0xff]
    %v111 = vld [vmem:[%s0 + $0x228] sm:$0xff]
    %v112 = vld [vmem:[%s0 + $0x230] sm:$0xff]
    %v113 = vld [vmem:[%s0 + $0x238] sm:$0xff]
    %v114 = vld [vmem:[#allocation2] sm:$0xff]
    %v115 = vld [vmem:[#allocation2 + $0x8] sm:$0x3]
    %v116 = vld [vmem:[%s1] sm:$0x1]
    %v118 = vlaneseq
    %v119 = vshrl.u32 %v118, 7
    %v120 = vsub.s32 0, %v119
    %v121 = vrot.slane %v116, %v120
    %v125 = vcombine.high %v114, %v114
    %v127 = vunpack.c.l.s4 1983009808
    %v128 = vunpack.c.0.s8 %v127
    %v129 = vlaneseq
    %v130 = vshrl.u32 %v129, 7
    %v131 = vsub.s32 %v128, %v130
    %v132 = vrot.slane %v114, %v131
    %v134 = vunpack.c.l.s4 1983009808
    %v135 = vunpack.c.0.s8 %v134
    %v136 = vlaneseq
    %v137 = vshrl.u32 %v136, 7
    %v138 = vsub.s32 %v135, %v137
    %v139 = vrot.slane %v125, %v138
    %v140 = vcombine.high %v132, %v132
    %v141 = vcombine.high %v139, %v139
    %v143 = vunpack.c.l.s4 1983009808
    %v144 = vunpack.c.0.s8 %v143
    %v145 = vlaneseq
    %v146 = vshrl.u32 %v145, 7
    %v147 = vsub.s32 %v144, %v146
    %v148 = vrot.slane %v115, %v147
    %vm153 = vcmask 523264
    %v154 = vsel %vm153, %v148, 0
    %156 = vmatprep.subr.mxu0 0.0
    %157 = vmatpush1.msra.mxu0 %v57
    %158 = vmatprep.subr.mxu0 0.0
    %159 = vmatpush1.msra.mxu0 %v56
    %160 = vmatprep.subr.mxu0 0.0
    %161 = vmatpush1.msra.mxu0 %v55
    %162 = vmatprep.subr.mxu0 0.0
    %163 = vmatpush1.msra.mxu0 %v54
    %164 = vmatprep.subr.mxu0 0.0
    %165 = vmatpush1.msra.mxu0 %v53
    %166 = vmatprep.subr.mxu0 0.0
    %167 = vmatpush1.msra.mxu0 %v52
    %168 = vmatprep.subr.mxu0 0.0
    %169 = vmatpush1.msra.mxu0 %v51
    %170 = vmatprep.subr.mxu0 0.0
    %171 = vmatpush1.msra.mxu0 %v50
    %172 = vmatprep.subr.mxu0 0.0
    %173 = vmatpush1.msra.mxu0 %v49
    %174 = vmatprep.subr.mxu0 0.0
    %175 = vmatpush1.msra.mxu0 %v48
    %176 = vmatprep.subr.mxu0 0.0
    %177 = vmatpush1.msra.mxu0 %v47
    %178 = vmatprep.subr.mxu0 0.0
    %179 = vmatpush1.msra.mxu0 %v46
    %180 = vmatprep.subr.mxu0 0.0
    %181 = vmatpush1.msra.mxu0 %v45
    %182 = vmatprep.subr.mxu0 0.0
    %183 = vmatpush1.msra.mxu0 %v44
    %184 = vmatprep.subr.mxu0 0.0
    %185 = vmatpush1.msra.mxu0 %v43
    %186 = vmatprep.subr.mxu0 0.0
    %187 = vmatpush1.msra.mxu0 %v42
    %188 = vmatprep.subr.mxu0 0.0
    %189 = vmatpush2.msra.mxu0 %v73
    %190 = vmatprep.subr.mxu0 0.0
    %191 = vmatpush2.msra.mxu0 %v72
    %192 = vmatprep.subr.mxu0 0.0
    %193 = vmatpush2.msra.mxu0 %v71
    %194 = vmatprep.subr.mxu0 0.0
    %195 = vmatpush2.msra.mxu0 %v70
    %196 = vmatprep.subr.mxu0 0.0
    %197 = vmatpush2.msra.mxu0 %v69
    %198 = vmatprep.subr.mxu0 0.0
    %199 = vmatpush2.msra.mxu0 %v68
    %200 = vmatprep.subr.mxu0 0.0
    %201 = vmatpush2.msra.mxu0 %v67
    %202 = vmatprep.subr.mxu0 0.0
    %203 = vmatpush2.msra.mxu0 %v66
    %204 = vmatprep.subr.mxu0 0.0
    %205 = vmatpush2.msra.mxu0 %v65
    %206 = vmatprep.subr.mxu0 0.0
    %207 = vmatpush2.msra.mxu0 %v64
    %208 = vmatprep.subr.mxu0 0.0
    %209 = vmatpush2.msra.mxu0 %v63
    %210 = vmatprep.subr.mxu0 0.0
    %211 = vmatpush2.msra.mxu0 %v62
    %212 = vmatprep.subr.mxu0 0.0
    %213 = vmatpush2.msra.mxu0 %v61
    %214 = vmatprep.subr.mxu0 0.0
    %215 = vmatpush2.msra.mxu0 %v60
    %216 = vmatprep.subr.mxu0 0.0
    %217 = vmatpush2.msra.mxu0 %v59
    %218 = vmatprep.subr.mxu0 0.0
    %219 = vmatpush2.msra.mxu0 %v58
    %220 = vmatprep.mubr.f32.mxu0 %v140
    %221 = vmatmul.mubr.f32.gmra.mxu0 %v132
    %v222 = vpop.f32.mrf.mxu0
    %v223 = vadd.f32 %v121, %v222
    %v224 = vpop.f32.mrf.mxu0
    %225 = vdwg.mxu0
    %226 = vmatprep.subr.mxu0 0.0
    %227 = vmatpush1.msra.mxu0 %v89
    %228 = vmatprep.subr.mxu0 0.0
    %229 = vmatpush1.msra.mxu0 %v88
    %230 = vmatprep.subr.mxu0 0.0
    %231 = vmatpush1.msra.mxu0 %v87
    %232 = vmatprep.subr.mxu0 0.0
    %233 = vmatpush1.msra.mxu0 %v86
    %234 = vmatprep.subr.mxu0 0.0
    %235 = vmatpush1.msra.mxu0 %v85
    %236 = vmatprep.subr.mxu0 0.0
    %237 = vmatpush1.msra.mxu0 %v84
    %238 = vmatprep.subr.mxu0 0.0
    %239 = vmatpush1.msra.mxu0 %v83
    %240 = vmatprep.subr.mxu0 0.0
    %241 = vmatpush1.msra.mxu0 %v82
    %242 = vmatprep.subr.mxu0 0.0
    %243 = vmatpush1.msra.mxu0 %v81
    %244 = vmatprep.subr.mxu0 0.0
    %245 = vmatpush1.msra.mxu0 %v80
    %246 = vmatprep.subr.mxu0 0.0
    %247 = vmatpush1.msra.mxu0 %v79
    %248 = vmatprep.subr.mxu0 0.0
    %249 = vmatpush1.msra.mxu0 %v78
    %250 = vmatprep.subr.mxu0 0.0
    %251 = vmatpush1.msra.mxu0 %v77
    %252 = vmatprep.subr.mxu0 0.0
    %253 = vmatpush1.msra.mxu0 %v76
    %254 = vmatprep.subr.mxu0 0.0
    %255 = vmatpush1.msra.mxu0 %v75
    %256 = vmatprep.subr.mxu0 0.0
    %257 = vmatpush1.msra.mxu0 %v74
    %258 = vmatprep.subr.mxu0 0.0
    %259 = vmatpush2.msra.mxu0 %v105
    %260 = vmatprep.subr.mxu0 0.0
    %261 = vmatpush2.msra.mxu0 %v104
    %262 = vmatprep.subr.mxu0 0.0
    %263 = vmatpush2.msra.mxu0 %v103
    %264 = vmatprep.subr.mxu0 0.0
    %265 = vmatpush2.msra.mxu0 %v102
    %266 = vmatprep.subr.mxu0 0.0
    %267 = vmatpush2.msra.mxu0 %v101
    %268 = vmatprep.subr.mxu0 0.0
    %269 = vmatpush2.msra.mxu0 %v100
    %270 = vmatprep.subr.mxu0 0.0
    %271 = vmatpush2.msra.mxu0 %v99
    %272 = vmatprep.subr.mxu0 0.0
    %273 = vmatpush2.msra.mxu0 %v98
    %274 = vmatprep.subr.mxu0 0.0
    %275 = vmatpush2.msra.mxu0 %v97
    %276 = vmatprep.subr.mxu0 0.0
    %277 = vmatpush2.msra.mxu0 %v96
    %278 = vmatprep.subr.mxu0 0.0
    %279 = vmatpush2.msra.mxu0 %v95
    %280 = vmatprep.subr.mxu0 0.0
    %281 = vmatpush2.msra.mxu0 %v94
    %282 = vmatprep.subr.mxu0 0.0
    %283 = vmatpush2.msra.mxu0 %v93
    %284 = vmatprep.subr.mxu0 0.0
    %285 = vmatpush2.msra.mxu0 %v92
    %286 = vmatprep.subr.mxu0 0.0
    %287 = vmatpush2.msra.mxu0 %v91
    %288 = vmatprep.subr.mxu0 0.0
    %289 = vmatpush2.msra.mxu0 %v90
    %290 = vmatprep.mubr.f32.mxu0 %v141
    %291 = vmatmul.mubr.f32.gmra.mxu0 %v139
    %v292 = vpop.f32.mrf.mxu0
    %v293 = vadd.f32 %v223, %v292
    %v294 = vpop.f32.mrf.mxu0
    %295 = vdwg.mxu0
    %296 = vmatprep.subr.mxu0 0.0
    %297 = vmatpush1.msra.mxu0 0.0
    %298 = vmatprep.subr.mxu0 0.0
    %299 = vmatpush1.msra.mxu0 0.0
    %300 = vmatprep.subr.mxu0 0.0
    %301 = vmatpush1.msra.mxu0 0.0
    %302 = vmatprep.subr.mxu0 0.0
    %303 = vmatpush1.msra.mxu0 0.0
    %304 = vmatprep.subr.mxu0 0.0
    %305 = vmatpush1.msra.mxu0 0.0
    %306 = vmatprep.subr.mxu0 0.0
    %307 = vmatpush1.msra.mxu0 0.0
    %308 = vmatprep.subr.mxu0 0.0
    %309 = vmatpush1.msra.mxu0 0.0
    %310 = vmatprep.subr.mxu0 0.0
    %311 = vmatpush1.msra.mxu0 0.0
    %312 = vmatprep.subr.mxu0 0.0
    %313 = vmatpush1.msra.mxu0 %v113
    %314 = vmatprep.subr.mxu0 0.0
    %315 = vmatpush1.msra.mxu0 %v112
    %316 = vmatprep.subr.mxu0 0.0
    %317 = vmatpush1.msra.mxu0 %v111
    %318 = vmatprep.subr.mxu0 0.0
    %319 = vmatpush1.msra.mxu0 %v110
    %320 = vmatprep.subr.mxu0 0.0
    %321 = vmatpush1.msra.mxu0 %v109
    %322 = vmatprep.subr.mxu0 0.0
    %323 = vmatpush1.msra.mxu0 %v108
    %324 = vmatprep.subr.mxu0 0.0
    %325 = vmatpush1.msra.mxu0 %v107
    %326 = vmatprep.subr.mxu0 0.0
    %327 = vmatpush1.msra.mxu0 %v106
    %328 = vmatprep.subr.mxu0 0.0
    %329 = vmatpush2.msra.mxu0 0.0
    %330 = vmatprep.subr.mxu0 0.0
    %331 = vmatpush2.msra.mxu0 0.0
    %332 = vmatprep.subr.mxu0 0.0
    %333 = vmatpush2.msra.mxu0 0.0
    %334 = vmatprep.subr.mxu0 0.0
    %335 = vmatpush2.msra.mxu0 0.0
    %336 = vmatprep.subr.mxu0 0.0
    %337 = vmatpush2.msra.mxu0 0.0
    %338 = vmatprep.subr.mxu0 0.0
    %339 = vmatpush2.msra.mxu0 0.0
    %340 = vmatprep.subr.mxu0 0.0
    %341 = vmatpush2.msra.mxu0 0.0
    %342 = vmatprep.subr.mxu0 0.0
    %343 = vmatpush2.msra.mxu0 0.0
    %344 = vmatprep.subr.mxu0 0.0
    %345 = vmatpush2.msra.mxu0 0.0
    %346 = vmatprep.subr.mxu0 0.0
    %347 = vmatpush2.msra.mxu0 0.0
    %348 = vmatprep.subr.mxu0 0.0
    %349 = vmatpush2.msra.mxu0 0.0
    %350 = vmatprep.subr.mxu0 0.0
    %351 = vmatpush2.msra.mxu0 0.0
    %352 = vmatprep.subr.mxu0 0.0
    %353 = vmatpush2.msra.mxu0 0.0
    %354 = vmatprep.subr.mxu0 0.0
    %355 = vmatpush2.msra.mxu0 0.0
    %356 = vmatprep.subr.mxu0 0.0
    %357 = vmatpush2.msra.mxu0 0.0
    %358 = vmatprep.subr.mxu0 0.0
    %359 = vmatpush2.msra.mxu0 0.0
    %360 = vmatprep.mubr.f32.mxu0 0.0
    %361 = vmatmul.mubr.f32.gmra.mxu0 %v154
    %v362 = vpop.f32.mrf.mxu0
    %v363 = vadd.f32 %v293, %v362
    %v364 = vpop.f32.mrf.mxu0
    %365 = vdwg.mxu0
    %v366 = vmax.f32 %v363, 0.0
    %vm367 = vcmask 517120
    %368 = vst.msk [vmem:[%s3] sm:$0x3] %vm367, %v366
    // Predicated region
    $region14: #{actor_critic_forward.8} parent=1 // pred_check
      _
    $region15: #{actor_critic_forward.8} parent=1 // pred_check_branch
      %370 = sbr.rel (0) target = $region17
    $region16: #{actor_critic_forward.8} parent=1 // pred_region
      _
    $region17: #{actor_critic_forward.8} parent=1 // pred_fallthru
      _
    // Predicated region
    $region18: #{actor_critic_forward.8} parent=1 // pred_check
      _
    $region19: #{actor_critic_forward.8} parent=1 // pred_check_branch
      %372 = sbr.rel (0) target = $region21
    $region20: #{actor_critic_forward.8} parent=1 // pred_region
      _
    $region21: #{actor_critic_forward.8} parent=1 // pred_fallthru
      _

</llo_original>
